<compile_context>
chip_gen: v6e
topology: v6e:2x2x1
jax: 0.10.0
libtpu: 0.0.40
codegen_flags: <defaults>
</compile_context>

<pallas_src>
import jax
import jax.numpy as jnp
from jax.experimental import pallas as pl
from jax.experimental.pallas import tpu as pltpu


def dsconv_kernel(x_ref, wdw_ref, wpw_ref, bias_ref, o_ref):
    # x_ref:    (1, H+2, W+2, C)  zero-padded NHWC input tile (one batch element)
    # wdw_ref:  (3, 3, C)         depthwise 3x3 weights, channels on lanes
    # wpw_ref:  (C, C2)           pointwise weights with BN scale pre-folded
    # bias_ref: (1, C2)           folded BN bias (beta - mean * scale)
    # o_ref:    (1, H, W, C2)     output tile
    _, H, W, C2 = o_ref.shape
    C = x_ref.shape[3]

    # Depthwise 3x3, stride 1 (padding already applied by the wrapper).
    # Nine shifted loads, each multiplied by a per-channel tap broadcast along
    # lanes -- pure VPU work, no relayout of the input tile.
    acc = None
    for dh in range(3):
        for dw in range(3):
            tap = wdw_ref[dh:dh + 1, dw:dw + 1, :]              # (1, 1, C)
            term = x_ref[0, dh:dh + H, dw:dw + W, :] * tap      # (H, W, C)
            acc = term if acc is None else acc + term

    # Pointwise 1x1 conv == matmul over channels (MXU).  BN scale is already
    # folded into wpw in the wrapper.
    flat = acc.reshape(H * W, C)
    y = jnp.dot(flat, wpw_ref[...], preferred_element_type=jnp.float32)  # (H*W, C2)

    # Folded BN bias + SiLU (exp on EUP; exact reciprocal keeps 1e-4 parity,
    # approx=True gives the EUP fast path when ~1e-3 error is acceptable).
    y = y + bias_ref[...]
    y = y * pl.reciprocal(1.0 + jnp.exp(-y), approx=False)

    o_ref[...] = y.reshape(1, H, W, C2).astype(o_ref.dtype)


def dsconv(x_nchw, w_dw, w_pw, bn_gamma, bn_beta, bn_mean, bn_var, eps=1e-5):
    """DSConv forward (default config: k=3, s=1, p=1, d=1, bias=False), eval-mode BN.

    x_nchw: (N, C, H, W) float32
    w_dw:   (C, 1, 3, 3)   depthwise conv weight (groups=C)
    w_pw:   (C2, C, 1, 1)  pointwise conv weight
    bn_*:   (C2,)          BatchNorm2d parameters / running stats
    returns (N, C2, H, W)
    """
    N, C, H, W = x_nchw.shape
    C2 = w_pw.shape[0]

    # NCHW -> NHWC plus the 3x3 'SAME' zero padding; XLA fuses this into a
    # single copy so padding costs no extra HBM round trip.
    x_pad = jnp.pad(jnp.transpose(x_nchw, (0, 2, 3, 1)),
                    ((0, 0), (1, 1), (1, 1), (0, 0)))

    # Depthwise weight (C, 1, 3, 3) -> (3, 3, C): channels on the lane axis.
    wdw = jnp.transpose(w_dw[:, 0, :, :], (1, 2, 0))

    # Fold eval-mode BatchNorm into the pointwise weight and a bias vector.
    scale = bn_gamma * jax.lax.rsqrt(bn_var + eps)                     # (C2,)
    wpw = jnp.transpose(w_pw[:, :, 0, 0], (1, 0)) * scale[None, :]     # (C, C2)
    bias = (bn_beta - bn_mean * scale).reshape(1, C2)

    out_nhwc = pl.pallas_call(
        dsconv_kernel,
        out_shape=jax.ShapeDtypeStruct((N, H, W, C2), x_nchw.dtype),
        grid_spec=pltpu.PrefetchScalarGridSpec(
            num_scalar_prefetch=0,
            grid=(N,),
            in_specs=[
                pl.BlockSpec((1, H + 2, W + 2, C), lambda n: (n, 0, 0, 0)),
                pl.BlockSpec((3, 3, C), lambda n: (0, 0, 0)),
                pl.BlockSpec((C, C2), lambda n: (0, 0)),
                pl.BlockSpec((1, C2), lambda n: (0, 0)),
            ],
            out_specs=pl.BlockSpec((1, H, W, C2), lambda n: (n, 0, 0, 0)),
        ),
        compiler_params=pltpu.CompilerParams(dimension_semantics=("parallel",)),
    )(x_pad, wdw, wpw, bias)

    # NHWC -> NCHW to match the PyTorch output convention.
    return jnp.transpose(out_nhwc, (0, 3, 1, 2))


if __name__ == "__main__":
    key = jax.random.PRNGKey(0)
    k_x, k_wd, k_wp, k_g, k_b, k_m, k_v = jax.random.split(key, 7)

    N, C, H, W = 2, 4, 16, 16
    C2 = 8
    eps = 1e-5

    x = jax.random.normal(k_x, (N, C, H, W), dtype=jnp.float32)
    w_dw = jax.random.normal(k_wd, (C, 1, 3, 3), dtype=jnp.float32) * 0.2
    w_pw = jax.random.normal(k_wp, (C2, C, 1, 1), dtype=jnp.float32) * 0.2
    bn_gamma = 1.0 + 0.1 * jax.random.normal(k_g, (C2,), dtype=jnp.float32)
    bn_beta = 0.1 * jax.random.normal(k_b, (C2,), dtype=jnp.float32)
    bn_mean = 0.1 * jax.random.normal(k_m, (C2,), dtype=jnp.float32)
    bn_var = jnp.abs(jax.random.normal(k_v, (C2,), dtype=jnp.float32)) + 0.5

    out = dsconv(x, w_dw, w_pw, bn_gamma, bn_beta, bn_mean, bn_var, eps)
    out = jax.block_until_ready(out)

    # Pure-JAX reference (eval-mode BN semantics, same as PyTorch .eval()).
    xp = jnp.pad(x, ((0, 0), (0, 0), (1, 1), (1, 1)))
    dw_out = jnp.zeros((N, C, H, W), jnp.float32)
    for i in range(3):
        for j in range(3):
            dw_out = dw_out + xp[:, :, i:i + H, j:j + W] * w_dw[:, 0, i, j][None, :, None, None]
    pw_out = jnp.einsum("nchw,oc->nohw", dw_out, w_pw[:, :, 0, 0],
                        precision=jax.lax.Precision.HIGHEST)
    scale = bn_gamma / jnp.sqrt(bn_var + eps)
    ref = pw_out * scale[None, :, None, None] + (bn_beta - bn_mean * scale)[None, :, None, None]
    ref = ref * jax.nn.sigmoid(ref)

    assert out.shape == (N, C2, H, W), out.shape
    max_err = float(jnp.max(jnp.abs(out - ref)))
    assert jnp.allclose(out, ref, atol=1e-4, rtol=1e-3), max_err
    print("KERNEL_OK")
</pallas_src>

<mosaic_0001>
module attributes {stable_mosaic.version = 11 : i64} {
  func.func @dsconv_kernel(%arg0: i32, %arg1: memref<1x18x18x4xf32, #tpu.memory_space<vmem>>, %arg2: memref<3x3x4xf32, #tpu.memory_space<vmem>>, %arg3: memref<4x8xf32, #tpu.memory_space<vmem>>, %arg4: memref<1x8xf32, #tpu.memory_space<vmem>>, %arg5: memref<1x16x16x8xf32, #tpu.memory_space<vmem>>) attributes {dimension_semantics = [#tpu.dimension_semantics<parallel>], iteration_bounds = array<i64: 2>, scalar_prefetch = 0 : i64, scratch_operands = 0 : i64, tpu.core_type = #tpu.core_type<tc>, window_params = [{transform_indices = @transform_0, window_bounds = array<i64: 1, 18, 18, 4>}, {pipeline_mode = #tpu.pipeline_mode<synchronous>, transform_indices = @transform_1, window_bounds = array<i64: 3, 3, 4>}, {pipeline_mode = #tpu.pipeline_mode<synchronous>, transform_indices = @transform_2, window_bounds = array<i64: 4, 8>}, {pipeline_mode = #tpu.pipeline_mode<synchronous>, transform_indices = @transform_3, window_bounds = array<i64: 1, 8>}, {transform_indices = @transform_4, window_bounds = array<i64: 1, 16, 16, 8>}]} {
    %c0 = arith.constant 0 : index
    %c0_0 = arith.constant 0 : index
    %c0_1 = arith.constant 0 : index
    %0 = vector.load %arg2[%c0, %c0_0, %c0_1] : memref<3x3x4xf32, #tpu.memory_space<vmem>>, vector<1x1x4xf32>
    %c0_2 = arith.constant 0 : index
    %c0_3 = arith.constant 0 : index
    %c0_4 = arith.constant 0 : index
    %c0_5 = arith.constant 0 : index
    %1 = vector.load %arg1[%c0_2, %c0_3, %c0_4, %c0_5] : memref<1x18x18x4xf32, #tpu.memory_space<vmem>>, vector<1x16x16x4xf32>
    %2 = vector.shape_cast %1 : vector<1x16x16x4xf32> to vector<16x16x4xf32>
    %3 = vector.broadcast %0 : vector<1x1x4xf32> to vector<16x16x4xf32>
    %4 = arith.mulf %2, %3 : vector<16x16x4xf32>
    %c0_6 = arith.constant 0 : index
    %c1 = arith.constant 1 : index
    %c0_7 = arith.constant 0 : index
    %5 = vector.load %arg2[%c0_6, %c1, %c0_7] : memref<3x3x4xf32, #tpu.memory_space<vmem>>, vector<1x1x4xf32>
    %c0_8 = arith.constant 0 : index
    %c0_9 = arith.constant 0 : index
    %c1_10 = arith.constant 1 : index
    %c0_11 = arith.constant 0 : index
    %6 = vector.load %arg1[%c0_8, %c0_9, %c1_10, %c0_11] : memref<1x18x18x4xf32, #tpu.memory_space<vmem>>, vector<1x16x16x4xf32>
    %7 = vector.shape_cast %6 : vector<1x16x16x4xf32> to vector<16x16x4xf32>
    %8 = vector.broadcast %5 : vector<1x1x4xf32> to vector<16x16x4xf32>
    %9 = arith.mulf %7, %8 : vector<16x16x4xf32>
    %10 = arith.addf %4, %9 : vector<16x16x4xf32>
    %c0_12 = arith.constant 0 : index
    %c2 = arith.constant 2 : index
    %c0_13 = arith.constant 0 : index
    %11 = vector.load %arg2[%c0_12, %c2, %c0_13] : memref<3x3x4xf32, #tpu.memory_space<vmem>>, vector<1x1x4xf32>
    %c0_14 = arith.constant 0 : index
    %c0_15 = arith.constant 0 : index
    %c2_16 = arith.constant 2 : index
    %c0_17 = arith.constant 0 : index
    %12 = vector.load %arg1[%c0_14, %c0_15, %c2_16, %c0_17] : memref<1x18x18x4xf32, #tpu.memory_space<vmem>>, vector<1x16x16x4xf32>
    %13 = vector.shape_cast %12 : vector<1x16x16x4xf32> to vector<16x16x4xf32>
    %14 = vector.broadcast %11 : vector<1x1x4xf32> to vector<16x16x4xf32>
    %15 = arith.mulf %13, %14 : vector<16x16x4xf32>
    %16 = arith.addf %10, %15 : vector<16x16x4xf32>
    %c1_18 = arith.constant 1 : index
    %c0_19 = arith.constant 0 : index
    %c0_20 = arith.constant 0 : index
    %17 = vector.load %arg2[%c1_18, %c0_19, %c0_20] : memref<3x3x4xf32, #tpu.memory_space<vmem>>, vector<1x1x4xf32>
    %c0_21 = arith.constant 0 : index
    %c1_22 = arith.constant 1 : index
    %c0_23 = arith.constant 0 : index
    %c0_24 = arith.constant 0 : index
    %18 = vector.load %arg1[%c0_21, %c1_22, %c0_23, %c0_24] : memref<1x18x18x4xf32, #tpu.memory_space<vmem>>, vector<1x16x16x4xf32>
    %19 = vector.shape_cast %18 : vector<1x16x16x4xf32> to vector<16x16x4xf32>
    %20 = vector.broadcast %17 : vector<1x1x4xf32> to vector<16x16x4xf32>
    %21 = arith.mulf %19, %20 : vector<16x16x4xf32>
    %22 = arith.addf %16, %21 : vector<16x16x4xf32>
    %c1_25 = arith.constant 1 : index
    %c1_26 = arith.constant 1 : index
    %c0_27 = arith.constant 0 : index
    %23 = vector.load %arg2[%c1_25, %c1_26, %c0_27] : memref<3x3x4xf32, #tpu.memory_space<vmem>>, vector<1x1x4xf32>
    %c0_28 = arith.constant 0 : index
    %c1_29 = arith.constant 1 : index
    %c1_30 = arith.constant 1 : index
    %c0_31 = arith.constant 0 : index
    %24 = vector.load %arg1[%c0_28, %c1_29, %c1_30, %c0_31] : memref<1x18x18x4xf32, #tpu.memory_space<vmem>>, vector<1x16x16x4xf32>
    %25 = vector.shape_cast %24 : vector<1x16x16x4xf32> to vector<16x16x4xf32>
    %26 = vector.broadcast %23 : vector<1x1x4xf32> to vector<16x16x4xf32>
    %27 = arith.mulf %25, %26 : vector<16x16x4xf32>
    %28 = arith.addf %22, %27 : vector<16x16x4xf32>
    %c1_32 = arith.constant 1 : index
    %c2_33 = arith.constant 2 : index
    %c0_34 = arith.constant 0 : index
    %29 = vector.load %arg2[%c1_32, %c2_33, %c0_34] : memref<3x3x4xf32, #tpu.memory_space<vmem>>, vector<1x1x4xf32>
    %c0_35 = arith.constant 0 : index
    %c1_36 = arith.constant 1 : index
    %c2_37 = arith.constant 2 : index
    %c0_38 = arith.constant 0 : index
    %30 = vector.load %arg1[%c0_35, %c1_36, %c2_37, %c0_38] : memref<1x18x18x4xf32, #tpu.memory_space<vmem>>, vector<1x16x16x4xf32>
    %31 = vector.shape_cast %30 : vector<1x16x16x4xf32> to vector<16x16x4xf32>
    %32 = vector.broadcast %29 : vector<1x1x4xf32> to vector<16x16x4xf32>
    %33 = arith.mulf %31, %32 : vector<16x16x4xf32>
    %34 = arith.addf %28, %33 : vector<16x16x4xf32>
    %c2_39 = arith.constant 2 : index
    %c0_40 = arith.constant 0 : index
    %c0_41 = arith.constant 0 : index
    %35 = vector.load %arg2[%c2_39, %c0_40, %c0_41] : memref<3x3x4xf32, #tpu.memory_space<vmem>>, vector<1x1x4xf32>
    %c0_42 = arith.constant 0 : index
    %c2_43 = arith.constant 2 : index
    %c0_44 = arith.constant 0 : index
    %c0_45 = arith.constant 0 : index
    %36 = vector.load %arg1[%c0_42, %c2_43, %c0_44, %c0_45] : memref<1x18x18x4xf32, #tpu.memory_space<vmem>>, vector<1x16x16x4xf32>
    %37 = vector.shape_cast %36 : vector<1x16x16x4xf32> to vector<16x16x4xf32>
    %38 = vector.broadcast %35 : vector<1x1x4xf32> to vector<16x16x4xf32>
    %39 = arith.mulf %37, %38 : vector<16x16x4xf32>
    %40 = arith.addf %34, %39 : vector<16x16x4xf32>
    %c2_46 = arith.constant 2 : index
    %c1_47 = arith.constant 1 : index
    %c0_48 = arith.constant 0 : index
    %41 = vector.load %arg2[%c2_46, %c1_47, %c0_48] : memref<3x3x4xf32, #tpu.memory_space<vmem>>, vector<1x1x4xf32>
    %c0_49 = arith.constant 0 : index
    %c2_50 = arith.constant 2 : index
    %c1_51 = arith.constant 1 : index
    %c0_52 = arith.constant 0 : index
    %42 = vector.load %arg1[%c0_49, %c2_50, %c1_51, %c0_52] : memref<1x18x18x4xf32, #tpu.memory_space<vmem>>, vector<1x16x16x4xf32>
    %43 = vector.shape_cast %42 : vector<1x16x16x4xf32> to vector<16x16x4xf32>
    %44 = vector.broadcast %41 : vector<1x1x4xf32> to vector<16x16x4xf32>
    %45 = arith.mulf %43, %44 : vector<16x16x4xf32>
    %46 = arith.addf %40, %45 : vector<16x16x4xf32>
    %c2_53 = arith.constant 2 : index
    %c2_54 = arith.constant 2 : index
    %c0_55 = arith.constant 0 : index
    %47 = vector.load %arg2[%c2_53, %c2_54, %c0_55] : memref<3x3x4xf32, #tpu.memory_space<vmem>>, vector<1x1x4xf32>
    %c0_56 = arith.constant 0 : index
    %c2_57 = arith.constant 2 : index
    %c2_58 = arith.constant 2 : index
    %c0_59 = arith.constant 0 : index
    %48 = vector.load %arg1[%c0_56, %c2_57, %c2_58, %c0_59] : memref<1x18x18x4xf32, #tpu.memory_space<vmem>>, vector<1x16x16x4xf32>
    %49 = vector.shape_cast %48 : vector<1x16x16x4xf32> to vector<16x16x4xf32>
    %50 = vector.broadcast %47 : vector<1x1x4xf32> to vector<16x16x4xf32>
    %51 = arith.mulf %49, %50 : vector<16x16x4xf32>
    %52 = arith.addf %46, %51 : vector<16x16x4xf32>
    %53 = vector.shape_cast %52 : vector<16x16x4xf32> to vector<256x4xf32>
    %c0_60 = arith.constant 0 : index
    %c0_61 = arith.constant 0 : index
    %54 = vector.load %arg3[%c0_60, %c0_61] : memref<4x8xf32, #tpu.memory_space<vmem>>, vector<4x8xf32>
    %cst = arith.constant dense<0.000000e+00> : vector<256x8xf32>
    %55 = tpu.matmul %53, %54, %cst {dimension_numbers = #tpu.dot_dimension_numbers<[1], [0], [0], [1], [0, 0, 1, 1], [], []>} : vector<256x4xf32>, vector<4x8xf32>, vector<256x8xf32> -> vector<256x8xf32>
    %c0_62 = arith.constant 0 : index
    %c0_63 = arith.constant 0 : index
    %56 = vector.load %arg4[%c0_62, %c0_63] : memref<1x8xf32, #tpu.memory_space<vmem>>, vector<1x8xf32>
    %57 = vector.broadcast %56 : vector<1x8xf32> to vector<256x8xf32>
    %58 = arith.addf %55, %57 : vector<256x8xf32>
    %cst_64 = arith.constant 0.000000e+00 : f32
    %59 = vector.broadcast %cst_64 : f32 to vector<256x8xf32>
    %60 = arith.subf %59, %58 : vector<256x8xf32>
    %61 = math.exp %60 : vector<256x8xf32>
    %cst_65 = arith.constant 1.000000e+00 : f32
    %62 = vector.broadcast %cst_65 : f32 to vector<256x8xf32>
    %63 = arith.addf %62, %61 : vector<256x8xf32>
    %64 = tpu.reciprocal %63 : vector<256x8xf32> -> vector<256x8xf32>
    %65 = arith.mulf %58, %64 : vector<256x8xf32>
    %66 = vector.shape_cast %65 : vector<256x8xf32> to vector<1x16x16x8xf32>
    %c0_66 = arith.constant 0 : index
    %c0_67 = arith.constant 0 : index
    %c0_68 = arith.constant 0 : index
    %c0_69 = arith.constant 0 : index
    %67 = vector.load %arg5[%c0_66, %c0_67, %c0_68, %c0_69] : memref<1x16x16x8xf32, #tpu.memory_space<vmem>>, vector<1x16x16x8xf32>
    tpu.vector_store %arg5[%c0_66, %c0_67, %c0_68, %c0_69], %66 {strides = array<i32>} : memref<1x16x16x8xf32, #tpu.memory_space<vmem>>, vector<1x16x16x8xf32>,
    return
  }
  func.func @transform_0(%arg0: i32) -> (i32, i32, i32, i32) {
    %c0_i32 = arith.constant 0 : i32
    %c0_i32_0 = arith.constant 0 : i32
    %c0_i32_1 = arith.constant 0 : i32
    %c0_i32_2 = arith.constant 0 : i32
    return %arg0, %c0_i32, %c0_i32_0, %c0_i32_1 : i32, i32, i32, i32
  }
  func.func @transform_1(%arg0: i32) -> (i32, i32, i32) {
    %c0_i32 = arith.constant 0 : i32
    %c0_i32_0 = arith.constant 0 : i32
    %c0_i32_1 = arith.constant 0 : i32
    %c0_i32_2 = arith.constant 0 : i32
    return %c0_i32, %c0_i32_0, %c0_i32_1 : i32, i32, i32
  }
  func.func @transform_2(%arg0: i32) -> (i32, i32) {
    %c0_i32 = arith.constant 0 : i32
    %c0_i32_0 = arith.constant 0 : i32
    %c0_i32_1 = arith.constant 0 : i32
    return %c0_i32, %c0_i32_0 : i32, i32
  }
  func.func @transform_3(%arg0: i32) -> (i32, i32) {
    %c0_i32 = arith.constant 0 : i32
    %c0_i32_0 = arith.constant 0 : i32
    %c0_i32_1 = arith.constant 0 : i32
    return %c0_i32, %c0_i32_0 : i32, i32
  }
  func.func @transform_4(%arg0: i32) -> (i32, i32, i32, i32) {
    %c0_i32 = arith.constant 0 : i32
    %c0_i32_0 = arith.constant 0 : i32
    %c0_i32_1 = arith.constant 0 : i32
    %c0_i32_2 = arith.constant 0 : i32
    return %arg0, %c0_i32, %c0_i32_0, %c0_i32_1 : i32, i32, i32, i32
  }
}

</mosaic_0001>

<llo_original>
// kernel: tpu_custom_call.1
$region0: #{tpu_custom_call.1}
  #allocation0 [shape = 'u32[]', space=smem, size = 0x4, offset = 0x4, fixed_abs, tag = 'smem constant byte address 0x4 - core index']
  #allocation1 [shape = 'u32[144,128]{1,0:T(1,128)}', space=vmem, size = 0x12000, scoped, tag = 'internal scratch']
  %s0 = inlined_call_operand.vmem [shape: f32[2,18,18,4], index: 0, kind: input, shape index: {}]
  %s1 = inlined_call_operand.vmem [shape: f32[3,3,4], index: 1, kind: input, shape index: {}]
  %s2 = inlined_call_operand.vmem [shape: f32[4,8], index: 2, kind: input, shape index: {}]
  %s3 = inlined_call_operand.vmem [shape: f32[1,8], index: 3, kind: input, shape index: {}]
  %s4 = inlined_call_operand.vmem [shape: f32[2,16,16,8], index: 4, kind: output, shape index: {}]
  %s5 = sld [smem:[#allocation0]]
  $region49: #{tpu_custom_call.1} parent=0
    _
  %s7 = ssub.s32 1, %s5
  %s8 = scalar_select 0, %s7, %s5
  loop: start=0, step=1, limit=4
  $region2: #{tpu_custom_call.1} parent=0 // loop_pre_header
    _
  $region3: #{tpu_custom_call.1} parent=0 // loop_header
    %s10 = sphi 0, %s14
    %p11 = scmp.ge.s32.totalorder %s10, 4
    %s20 = sphi 0, %s22
    %s23 = sphi 0, %s20
    %s24 = sphi 0, %s23
    %s40 = sphi 0, %s24
    %s44 = sphi 0, %s44
    %s46 = sphi 0, %s44
    %s47 = sphi 0, %s46
    %s61 = sphi 0, %s47
    %s65 = sphi 0, %s65
    %s67 = sphi 0, %s65
    %s68 = sphi 0, %s67
    %s82 = sphi 0, %s68
    %s86 = sphi 0, %s86
    %s88 = sphi 0, %s86
    %s89 = sphi 0, %s88
    %s103 = sphi 0, %s89
    %s109 = sphi 0, %s111
    %s112 = sphi 0, %s109
    %s113 = sphi 0, %s112
    %s129 = sphi 0, %s113
  $region4: #{tpu_custom_call.1} parent=0 // loop_header_branch
    %13 = sbr.rel (%p11) target = $region8
  $region5: #{tpu_custom_call.1} parent=0 // loop_body
    %s15 = ssub.s32 %s10, 1
    %s16 = ssub.s32 %s10, 2
    %s17 = sadd.s32 %s10, 1
    %s18 = ssub.s32 %s10, %s17
    %p19 = scmp.eq.s32.totalorder %s18, 0
    %s21 = sadd.s32 %s20, 1
    %s22 = scalar_select %p19, %s20, %s21
    %p25 = pneg %p19
    %p26 = scmp.eq.s32.totalorder %s10, 1
    %p27 = por %p25, %p26
    %p28 = scmp.ne.s32.totalorder %s20, %s23
    %p29 = scmp.eq.s32.totalorder %s10, 0
    %p30 = por %p28, %p29
    %p31 = scmp.ne.s32.totalorder %s20, %s23
    %p32 = scmp.eq.s32.totalorder %s15, 1
    %p33 = por %p31, %p32
    %p34 = scmp.ne.s32.totalorder %s23, %s24
    %p35 = scmp.eq.s32.totalorder %s15, 0
    %p36 = por %p34, %p35
    %p37 = scmp.ne.s32.totalorder %s23, %s24
    %p38 = scmp.eq.s32.totalorder %s16, 1
    %p39 = por %p37, %p38
    %p41 = scmp.ne.s32.totalorder %s24, %s40
    %p42 = scmp.eq.s32.totalorder %s16, 0
    %p43 = por %p41, %p42
    %s45 = sadd.s32 %s44, 1
    %p48 = scmp.eq.s32.totalorder %s10, 1
    %p49 = scmp.ne.s32.totalorder %s44, %s46
    %p50 = scmp.eq.s32.totalorder %s10, 0
    %p51 = por %p49, %p50
    %p52 = scmp.ne.s32.totalorder %s44, %s46
    %p53 = scmp.eq.s32.totalorder %s15, 1
    %p54 = por %p52, %p53
    %p55 = scmp.ne.s32.totalorder %s46, %s47
    %p56 = scmp.eq.s32.totalorder %s15, 0
    %p57 = por %p55, %p56
    %p58 = scmp.ne.s32.totalorder %s46, %s47
    %p59 = scmp.eq.s32.totalorder %s16, 1
    %p60 = por %p58, %p59
    %p62 = scmp.ne.s32.totalorder %s47, %s61
    %p63 = scmp.eq.s32.totalorder %s16, 0
    %p64 = por %p62, %p63
    %s66 = sadd.s32 %s65, 1
    %p69 = scmp.eq.s32.totalorder %s10, 1
    %p70 = scmp.ne.s32.totalorder %s65, %s67
    %p71 = scmp.eq.s32.totalorder %s10, 0
    %p72 = por %p70, %p71
    %p73 = scmp.ne.s32.totalorder %s65, %s67
    %p74 = scmp.eq.s32.totalorder %s15, 1
    %p75 = por %p73, %p74
    %p76 = scmp.ne.s32.totalorder %s67, %s68
    %p77 = scmp.eq.s32.totalorder %s15, 0
    %p78 = por %p76, %p77
    %p79 = scmp.ne.s32.totalorder %s67, %s68
    %p80 = scmp.eq.s32.totalorder %s16, 1
    %p81 = por %p79, %p80
    %p83 = scmp.ne.s32.totalorder %s68, %s82
    %p84 = scmp.eq.s32.totalorder %s16, 0
    %p85 = por %p83, %p84
    %s87 = sadd.s32 %s86, 1
    %p90 = scmp.eq.s32.totalorder %s10, 1
    %p91 = scmp.ne.s32.totalorder %s86, %s88
    %p92 = scmp.eq.s32.totalorder %s10, 0
    %p93 = por %p91, %p92
    %p94 = scmp.ne.s32.totalorder %s86, %s88
    %p95 = scmp.eq.s32.totalorder %s15, 1
    %p96 = por %p94, %p95
    %p97 = scmp.ne.s32.totalorder %s88, %s89
    %p98 = scmp.eq.s32.totalorder %s15, 0
    %p99 = por %p97, %p98
    %p100 = scmp.ne.s32.totalorder %s88, %s89
    %p101 = scmp.eq.s32.totalorder %s16, 1
    %p102 = por %p100, %p101
    %p104 = scmp.ne.s32.totalorder %s89, %s103
    %p105 = scmp.eq.s32.totalorder %s16, 0
    %p106 = por %p104, %p105
    %s107 = ssub.s32 %s10, %s17
    %p108 = scmp.eq.s32.totalorder %s107, 0
    %s110 = sadd.s32 %s109, 1
    %s111 = scalar_select %p108, %s109, %s110
    %p114 = pneg %p108
    %p115 = scmp.eq.s32.totalorder %s10, 1
    %p116 = por %p114, %p115
    %p117 = scmp.ne.s32.totalorder %s109, %s112
    %p118 = scmp.eq.s32.totalorder %s10, 0
    %p119 = por %p117, %p118
    %p120 = scmp.ne.s32.totalorder %s109, %s112
    %p121 = scmp.eq.s32.totalorder %s15, 1
    %p122 = por %p120, %p121
    %p123 = scmp.ne.s32.totalorder %s112, %s113
    %p124 = scmp.eq.s32.totalorder %s15, 0
    %p125 = por %p123, %p124
    %p126 = scmp.ne.s32.totalorder %s112, %s113
    %p127 = scmp.eq.s32.totalorder %s16, 1
    %p128 = por %p126, %p127
    %p130 = scmp.ne.s32.totalorder %s113, %s129
    %p131 = scmp.eq.s32.totalorder %s16, 0
    %p132 = por %p130, %p131
    %p133 = scmp.le.s32.totalorder 1, %s10
    %p134 = scmp.lt.s32.totalorder %s10, 3
    %p135 = pnand %p133, %p134
    %p136 = pneg %p135
    // Predicated region
    $region9: #{tpu_custom_call.1} parent=5 // pred_check
      _
    $region10: #{tpu_custom_call.1} parent=5 // pred_check_branch
      %138 = sbr.rel (%p135) target = $region12
    $region11: #{tpu_custom_call.1} parent=5 // pred_region
      %s139 = ssub.s32 %s10, 1
      // Predicated region
      $region13: #{tpu_custom_call.1} parent=11 // pred_check
        %p140 = pneg %p57
      $region14: #{tpu_custom_call.1} parent=11 // pred_check_branch
        %142 = sbr.rel (%p140) target = $region16
      $region15: #{tpu_custom_call.1} parent=11 // pred_region
        _
      $region16: #{tpu_custom_call.1} parent=11 // pred_fallthru
        _
      // Predicated region
      $region17: #{tpu_custom_call.1} parent=11 // pred_check
        %p143 = pneg %p78
      $region18: #{tpu_custom_call.1} parent=11 // pred_check_branch
        %145 = sbr.rel (%p143) target = $region20
      $region19: #{tpu_custom_call.1} parent=11 // pred_region
        _
      $region20: #{tpu_custom_call.1} parent=11 // pred_fallthru
        _
      // Predicated region
      $region21: #{tpu_custom_call.1} parent=11 // pred_check
        %p146 = pneg %p99
      $region22: #{tpu_custom_call.1} parent=11 // pred_check_branch
        %148 = sbr.rel (%p146) target = $region24
      $region23: #{tpu_custom_call.1} parent=11 // pred_region
        _
      $region24: #{tpu_custom_call.1} parent=11 // pred_fallthru
        _
    $region12: #{tpu_custom_call.1} parent=5 // pred_fallthru
      _
    %p149 = scmp.lt.s32.totalorder %s10, 2
    // Predicated region
    $region25: #{tpu_custom_call.1} parent=5 // pred_check
      %p150 = pneg %p149
    $region26: #{tpu_custom_call.1} parent=5 // pred_check_branch
      %152 = sbr.rel (%p150) target = $region28
    $region27: #{tpu_custom_call.1} parent=5 // pred_region
      // Predicated region
      $region29: #{tpu_custom_call.1} parent=27 // pred_check
        %p153 = pneg %p30
      $region30: #{tpu_custom_call.1} parent=27 // pred_check_branch
        %155 = sbr.rel (%p153) target = $region32
      $region31: #{tpu_custom_call.1} parent=27 // pred_region
        %p156 = scmp.lt.s32.totalorder %s10, 1
        %s157 = scalar_select %p156, %s10, 1
        %s158 = smul.addr %s157, 54
        %s159 = smul.addr %s158, 8
        %s160 = scalar_lea.vmem %s0, %s159
      $region32: #{tpu_custom_call.1} parent=27 // pred_fallthru
        _
    $region28: #{tpu_custom_call.1} parent=5 // pred_fallthru
      _
    %p161 = scmp.le.s32.totalorder 1, %s10
    %p162 = scmp.lt.s32.totalorder %s10, 3
    %p163 = pnand %p161, %p162
    %p164 = pneg %p163
    // Predicated region
    $region33: #{tpu_custom_call.1} parent=5 // pred_check
      _
    $region34: #{tpu_custom_call.1} parent=5 // pred_check_branch
      %166 = sbr.rel (%p163) target = $region36
    $region35: #{tpu_custom_call.1} parent=5 // pred_region
      %s167 = ssub.s32 %s10, 1
      %p168 = scmp.lt.s32.totalorder %s15, 1
      %s169 = scalar_select %p168, %s15, 1
      %s170 = smul.addr %s169, 54
      %s171 = smul.addr %s170, 8
      %s172 = scalar_lea.vmem %s0, %s171
      %p173 = pneg %p36
      %p174 = pneg %p33
      %p175 = pneg %p57
      %p176 = pneg %p54
      %p177 = pneg %p78
      %p178 = pneg %p75
      %p179 = pneg %p99
      %p180 = pneg %p96
      %p181 = pneg %p125
      %p182 = pneg %p122
      %p183 = scmp.lt.s32.totalorder %s15, 1
      %s184 = scalar_select %p183, %s15, 1
      %s185 = smul.addr %s184, 32
      %s186 = smul.addr %s185, 8
      %s187 = scalar_lea.vmem %s4, %s186
      %p188 = scmp.lt.s32.totalorder %s15, 1
      %s189 = scalar_select %p188, %s15, 1
      %s190 = smul.addr %s189, 54
      %s191 = smul.addr %s190, 8
      %s192 = scalar_lea.vmem %s0, %s191
      %p193 = scmp.lt.s32.totalorder %s15, 1
      %s194 = scalar_select %p193, %s15, 1
      %s195 = smul.addr %s194, 32
      %s196 = smul.addr %s195, 8
      %s197 = scalar_lea.vmem %s4, %s196
      %v198 = vld [vmem:[%s1] sm:$0x1]
      %v199 = vld [vmem:[%s192] sm:$0xff]
      %v200 = vld [vmem:[%s192 + $0x8] sm:$0xff]
      %v201 = vld [vmem:[%s192 + $0x18] sm:$0xff]
      %v202 = vld [vmem:[%s192 + $0x20] sm:$0xff]
      %v203 = vld [vmem:[%s192 + $0x30] sm:$0xff]
      %v204 = vld [vmem:[%s192 + $0x38] sm:$0xff]
      %v205 = vld [vmem:[%s192 + $0x48] sm:$0xff]
      %v206 = vld [vmem:[%s192 + $0x50] sm:$0xff]
      %v207 = vld [vmem:[%s192 + $0x60] sm:$0xff]
      %v208 = vld [vmem:[%s192 + $0x68] sm:$0xff]
      %v209 = vld [vmem:[%s192 + $0x78] sm:$0xff]
      %v210 = vld [vmem:[%s192 + $0x80] sm:$0xff]
      %v211 = vld [vmem:[%s192 + $0x90] sm:$0xff]
      %v212 = vld [vmem:[%s192 + $0x98] sm:$0xff]
      %v213 = vld [vmem:[%s192 + $0xa8] sm:$0xff]
      %v214 = vld [vmem:[%s192 + $0xb0] sm:$0xff]
      %v215 = vld [vmem:[%s192 + $0xc0] sm:$0xff]
      %v216 = vld [vmem:[%s192 + $0xc8] sm:$0xff]
      %v217 = vld [vmem:[%s192 + $0xd8] sm:$0xff]
      %v218 = vld [vmem:[%s192 + $0xe0] sm:$0xff]
      %v219 = vld [vmem:[%s192 + $0xf0] sm:$0xff]
      %v220 = vld [vmem:[%s192 + $0xf8] sm:$0xff]
      %v221 = vld [vmem:[%s192 + $0x108] sm:$0xff]
      %v222 = vld [vmem:[%s192 + $0x110] sm:$0xff]
      %v223 = vld [vmem:[%s192 + $0x120] sm:$0xff]
      %v224 = vld [vmem:[%s192 + $0x128] sm:$0xff]
      %v225 = vld [vmem:[%s192 + $0x138] sm:$0xff]
      %v226 = vld [vmem:[%s192 + $0x140] sm:$0xff]
      %v227 = vld [vmem:[%s192 + $0x150] sm:$0xff]
      %v228 = vld [vmem:[%s192 + $0x158] sm:$0xff]
      %v229 = vld [vmem:[%s192 + $0x168] sm:$0xff]
      %v230 = vld [vmem:[%s192 + $0x170] sm:$0xff]
      %v231 = vlaneseq
      %v232 = vshrl.u32 %v231, 7
      %v233 = vsub.s32 0, %v232
      %v234 = vrot.slane %v198, %v233
      %v235 = vmul.f32 %v199, %v234
      %v236 = vmul.f32 %v200, %v234
      %v237 = vmul.f32 %v201, %v234
      %v238 = vmul.f32 %v202, %v234
      %v239 = vmul.f32 %v203, %v234
      %v240 = vmul.f32 %v204, %v234
      %v241 = vmul.f32 %v205, %v234
      %v242 = vmul.f32 %v206, %v234
      %v243 = vmul.f32 %v207, %v234
      %v244 = vmul.f32 %v208, %v234
      %v245 = vmul.f32 %v209, %v234
      %v246 = vmul.f32 %v210, %v234
      %v247 = vmul.f32 %v211, %v234
      %v248 = vmul.f32 %v212, %v234
      %v249 = vmul.f32 %v213, %v234
      %v250 = vmul.f32 %v214, %v234
      %v251 = vmul.f32 %v215, %v234
      %v252 = vmul.f32 %v216, %v234
      %v253 = vmul.f32 %v217, %v234
      %v254 = vmul.f32 %v218, %v234
      %v255 = vmul.f32 %v219, %v234
      %v256 = vmul.f32 %v220, %v234
      %v257 = vmul.f32 %v221, %v234
      %v258 = vmul.f32 %v222, %v234
      %v259 = vmul.f32 %v223, %v234
      %v260 = vmul.f32 %v224, %v234
      %v261 = vmul.f32 %v225, %v234
      %v262 = vmul.f32 %v226, %v234
      %v263 = vmul.f32 %v227, %v234
      %v264 = vmul.f32 %v228, %v234
      %v265 = vmul.f32 %v229, %v234
      %v266 = vmul.f32 %v230, %v234
      %v267 = vld [vmem:[%s1 + $0x1] sm:$0x1]
      %v268 = vld [vmem:[%s192 + $0x1] sm:$0xff]
      %v269 = vld [vmem:[%s192 + $0x9] sm:$0xff]
      %v270 = vld [vmem:[%s192 + $0x19] sm:$0xff]
      %v271 = vld [vmem:[%s192 + $0x21] sm:$0xff]
      %v272 = vld [vmem:[%s192 + $0x31] sm:$0xff]
      %v273 = vld [vmem:[%s192 + $0x39] sm:$0xff]
      %v274 = vld [vmem:[%s192 + $0x49] sm:$0xff]
      %v275 = vld [vmem:[%s192 + $0x51] sm:$0xff]
      %v276 = vld [vmem:[%s192 + $0x61] sm:$0xff]
      %v277 = vld [vmem:[%s192 + $0x69] sm:$0xff]
      %v278 = vld [vmem:[%s192 + $0x79] sm:$0xff]
      %v279 = vld [vmem:[%s192 + $0x81] sm:$0xff]
      %v280 = vld [vmem:[%s192 + $0x91] sm:$0xff]
      %v281 = vld [vmem:[%s192 + $0x99] sm:$0xff]
      %v282 = vld [vmem:[%s192 + $0xa9] sm:$0xff]
      %v283 = vld [vmem:[%s192 + $0xb1] sm:$0xff]
      %v284 = vld [vmem:[%s192 + $0xc1] sm:$0xff]
      %v285 = vld [vmem:[%s192 + $0xc9] sm:$0xff]
      %v286 = vld [vmem:[%s192 + $0xd9] sm:$0xff]
      %v287 = vld [vmem:[%s192 + $0xe1] sm:$0xff]
      %v288 = vld [vmem:[%s192 + $0xf1] sm:$0xff]
      %v289 = vld [vmem:[%s192 + $0xf9] sm:$0xff]
      %v290 = vld [vmem:[%s192 + $0x109] sm:$0xff]
      %v291 = vld [vmem:[%s192 + $0x111] sm:$0xff]
      %v292 = vld [vmem:[%s192 + $0x121] sm:$0xff]
      %v293 = vld [vmem:[%s192 + $0x129] sm:$0xff]
      %v294 = vld [vmem:[%s192 + $0x139] sm:$0xff]
      %v295 = vld [vmem:[%s192 + $0x141] sm:$0xff]
      %v296 = vld [vmem:[%s192 + $0x151] sm:$0xff]
      %v297 = vld [vmem:[%s192 + $0x159] sm:$0xff]
      %v298 = vld [vmem:[%s192 + $0x169] sm:$0xff]
      %v299 = vld [vmem:[%s192 + $0x171] sm:$0xff]
      %v300 = vlaneseq
      %v301 = vshrl.u32 %v300, 7
      %v302 = vsub.s32 0, %v301
      %v303 = vrot.slane %v267, %v302
      %v304 = vmul.f32 %v268, %v303
      %v305 = vmul.f32 %v269, %v303
      %v306 = vmul.f32 %v270, %v303
      %v307 = vmul.f32 %v271, %v303
      %v308 = vmul.f32 %v272, %v303
      %v309 = vmul.f32 %v273, %v303
      %v310 = vmul.f32 %v274, %v303
      %v311 = vmul.f32 %v275, %v303
      %v312 = vmul.f32 %v276, %v303
      %v313 = vmul.f32 %v277, %v303
      %v314 = vmul.f32 %v278, %v303
      %v315 = vmul.f32 %v279, %v303
      %v316 = vmul.f32 %v280, %v303
      %v317 = vmul.f32 %v281, %v303
      %v318 = vmul.f32 %v282, %v303
      %v319 = vmul.f32 %v283, %v303
      %v320 = vmul.f32 %v284, %v303
      %v321 = vmul.f32 %v285, %v303
      %v322 = vmul.f32 %v286, %v303
      %v323 = vmul.f32 %v287, %v303
      %v324 = vmul.f32 %v288, %v303
      %v325 = vmul.f32 %v289, %v303
      %v326 = vmul.f32 %v290, %v303
      %v327 = vmul.f32 %v291, %v303
      %v328 = vmul.f32 %v292, %v303
      %v329 = vmul.f32 %v293, %v303
      %v330 = vmul.f32 %v294, %v303
      %v331 = vmul.f32 %v295, %v303
      %v332 = vmul.f32 %v296, %v303
      %v333 = vmul.f32 %v297, %v303
      %v334 = vmul.f32 %v298, %v303
      %v335 = vmul.f32 %v299, %v303
      %v336 = vadd.f32 %v235, %v304
      %v337 = vadd.f32 %v236, %v305
      %v338 = vadd.f32 %v237, %v306
      %v339 = vadd.f32 %v238, %v307
      %v340 = vadd.f32 %v239, %v308
      %v341 = vadd.f32 %v240, %v309
      %v342 = vadd.f32 %v241, %v310
      %v343 = vadd.f32 %v242, %v311
      %v344 = vadd.f32 %v243, %v312
      %v345 = vadd.f32 %v244, %v313
      %v346 = vadd.f32 %v245, %v314
      %v347 = vadd.f32 %v246, %v315
      %v348 = vadd.f32 %v247, %v316
      %v349 = vadd.f32 %v248, %v317
      %v350 = vadd.f32 %v249, %v318
      %v351 = vadd.f32 %v250, %v319
      %v352 = vadd.f32 %v251, %v320
      %v353 = vadd.f32 %v252, %v321
      %v354 = vadd.f32 %v253, %v322
      %v355 = vadd.f32 %v254, %v323
      %v356 = vadd.f32 %v255, %v324
      %v357 = vadd.f32 %v256, %v325
      %v358 = vadd.f32 %v257, %v326
      %v359 = vadd.f32 %v258, %v327
      %v360 = vadd.f32 %v259, %v328
      %v361 = vadd.f32 %v260, %v329
      %v362 = vadd.f32 %v261, %v330
      %v363 = vadd.f32 %v262, %v331
      %v364 = vadd.f32 %v263, %v332
      %v365 = vadd.f32 %v264, %v333
      %v366 = vadd.f32 %v265, %v334
      %v367 = vadd.f32 %v266, %v335
      %v368 = vld [vmem:[%s1 + $0x2] sm:$0x1]
      %v369 = vld [vmem:[%s192 + $0x2] sm:$0xff]
      %v370 = vld [vmem:[%s192 + $0xa] sm:$0xff]
      %v371 = vld [vmem:[%s192 + $0x1a] sm:$0xff]
      %v372 = vld [vmem:[%s192 + $0x22] sm:$0xff]
      %v373 = vld [vmem:[%s192 + $0x32] sm:$0xff]
      %v374 = vld [vmem:[%s192 + $0x3a] sm:$0xff]
      %v375 = vld [vmem:[%s192 + $0x4a] sm:$0xff]
      %v376 = vld [vmem:[%s192 + $0x52] sm:$0xff]
      %v377 = vld [vmem:[%s192 + $0x62] sm:$0xff]
      %v378 = vld [vmem:[%s192 + $0x6a] sm:$0xff]
      %v379 = vld [vmem:[%s192 + $0x7a] sm:$0xff]
      %v380 = vld [vmem:[%s192 + $0x82] sm:$0xff]
      %v381 = vld [vmem:[%s192 + $0x92] sm:$0xff]
      %v382 = vld [vmem:[%s192 + $0x9a] sm:$0xff]
      %v383 = vld [vmem:[%s192 + $0xaa] sm:$0xff]
      %v384 = vld [vmem:[%s192 + $0xb2] sm:$0xff]
      %v385 = vld [vmem:[%s192 + $0xc2] sm:$0xff]
      %v386 = vld [vmem:[%s192 + $0xca] sm:$0xff]
      %v387 = vld [vmem:[%s192 + $0xda] sm:$0xff]
      %v388 = vld [vmem:[%s192 + $0xe2] sm:$0xff]
      %v389 = vld [vmem:[%s192 + $0xf2] sm:$0xff]
      %v390 = vld [vmem:[%s192 + $0xfa] sm:$0xff]
      %v391 = vld [vmem:[%s192 + $0x10a] sm:$0xff]
      %v392 = vld [vmem:[%s192 + $0x112] sm:$0xff]
      %v393 = vld [vmem:[%s192 + $0x122] sm:$0xff]
      %v394 = vld [vmem:[%s192 + $0x12a] sm:$0xff]
      %v395 = vld [vmem:[%s192 + $0x13a] sm:$0xff]
      %v396 = vld [vmem:[%s192 + $0x142] sm:$0xff]
      %v397 = vld [vmem:[%s192 + $0x152] sm:$0xff]
      %v398 = vld [vmem:[%s192 + $0x15a] sm:$0xff]
      %v399 = vld [vmem:[%s192 + $0x16a] sm:$0xff]
      %v400 = vld [vmem:[%s192 + $0x172] sm:$0xff]
      %v401 = vlaneseq
      %v402 = vshrl.u32 %v401, 7
      %v403 = vsub.s32 0, %v402
      %v404 = vrot.slane %v368, %v403
      %v405 = vmul.f32 %v369, %v404
      %v406 = vmul.f32 %v370, %v404
      %v407 = vmul.f32 %v371, %v404
      %v408 = vmul.f32 %v372, %v404
      %v409 = vmul.f32 %v373, %v404
      %v410 = vmul.f32 %v374, %v404
      %v411 = vmul.f32 %v375, %v404
      %v412 = vmul.f32 %v376, %v404
      %v413 = vmul.f32 %v377, %v404
      %v414 = vmul.f32 %v378, %v404
      %v415 = vmul.f32 %v379, %v404
      %v416 = vmul.f32 %v380, %v404
      %v417 = vmul.f32 %v381, %v404
      %v418 = vmul.f32 %v382, %v404
      %v419 = vmul.f32 %v383, %v404
      %v420 = vmul.f32 %v384, %v404
      %v421 = vmul.f32 %v385, %v404
      %v422 = vmul.f32 %v386, %v404
      %v423 = vmul.f32 %v387, %v404
      %v424 = vmul.f32 %v388, %v404
      %v425 = vmul.f32 %v389, %v404
      %v426 = vmul.f32 %v390, %v404
      %v427 = vmul.f32 %v391, %v404
      %v428 = vmul.f32 %v392, %v404
      %v429 = vmul.f32 %v393, %v404
      %v430 = vmul.f32 %v394, %v404
      %v431 = vmul.f32 %v395, %v404
      %v432 = vmul.f32 %v396, %v404
      %v433 = vmul.f32 %v397, %v404
      %v434 = vmul.f32 %v398, %v404
      %v435 = vmul.f32 %v399, %v404
      %v436 = vmul.f32 %v400, %v404
      %v437 = vadd.f32 %v336, %v405
      %v438 = vadd.f32 %v337, %v406
      %v439 = vadd.f32 %v338, %v407
      %v440 = vadd.f32 %v339, %v408
      %v441 = vadd.f32 %v340, %v409
      %v442 = vadd.f32 %v341, %v410
      %v443 = vadd.f32 %v342, %v411
      %v444 = vadd.f32 %v343, %v412
      %v445 = vadd.f32 %v344, %v413
      %v446 = vadd.f32 %v345, %v414
      %v447 = vadd.f32 %v346, %v415
      %v448 = vadd.f32 %v347, %v416
      %v449 = vadd.f32 %v348, %v417
      %v450 = vadd.f32 %v349, %v418
      %v451 = vadd.f32 %v350, %v419
      %v452 = vadd.f32 %v351, %v420
      %v453 = vadd.f32 %v352, %v421
      %v454 = vadd.f32 %v353, %v422
      %v455 = vadd.f32 %v354, %v423
      %v456 = vadd.f32 %v355, %v424
      %v457 = vadd.f32 %v356, %v425
      %v458 = vadd.f32 %v357, %v426
      %v459 = vadd.f32 %v358, %v427
      %v460 = vadd.f32 %v359, %v428
      %v461 = vadd.f32 %v360, %v429
      %v462 = vadd.f32 %v361, %v430
      %v463 = vadd.f32 %v362, %v431
      %v464 = vadd.f32 %v363, %v432
      %v465 = vadd.f32 %v364, %v433
      %v466 = vadd.f32 %v365, %v434
      %v467 = vadd.f32 %v366, %v435
      %v468 = vadd.f32 %v367, %v436
      %s469 = scalar_lea.vmem %s1, 4
      %v470 = vld [vmem:[%s469] sm:$0x1]
      %s471 = scalar_lea.vmem %s192, 24
      %v472 = vld [vmem:[%s471] sm:$0xff]
      %v473 = vld [vmem:[%s471 + $0x8] sm:$0xff]
      %v474 = vld [vmem:[%s471 + $0x18] sm:$0xff]
      %v475 = vld [vmem:[%s471 + $0x20] sm:$0xff]
      %v476 = vld [vmem:[%s471 + $0x30] sm:$0xff]
      %v477 = vld [vmem:[%s471 + $0x38] sm:$0xff]
      %v478 = vld [vmem:[%s471 + $0x48] sm:$0xff]
      %v479 = vld [vmem:[%s471 + $0x50] sm:$0xff]
      %v480 = vld [vmem:[%s471 + $0x60] sm:$0xff]
      %v481 = vld [vmem:[%s471 + $0x68] sm:$0xff]
      %v482 = vld [vmem:[%s471 + $0x78] sm:$0xff]
      %v483 = vld [vmem:[%s471 + $0x80] sm:$0xff]
      %v484 = vld [vmem:[%s471 + $0x90] sm:$0xff]
      %v485 = vld [vmem:[%s471 + $0x98] sm:$0xff]
      %v486 = vld [vmem:[%s471 + $0xa8] sm:$0xff]
      %v487 = vld [vmem:[%s471 + $0xb0] sm:$0xff]
      %v488 = vld [vmem:[%s471 + $0xc0] sm:$0xff]
      %v489 = vld [vmem:[%s471 + $0xc8] sm:$0xff]
      %v490 = vld [vmem:[%s471 + $0xd8] sm:$0xff]
      %v491 = vld [vmem:[%s471 + $0xe0] sm:$0xff]
      %v492 = vld [vmem:[%s471 + $0xf0] sm:$0xff]
      %v493 = vld [vmem:[%s471 + $0xf8] sm:$0xff]
      %v494 = vld [vmem:[%s471 + $0x108] sm:$0xff]
      %v495 = vld [vmem:[%s471 + $0x110] sm:$0xff]
      %v496 = vld [vmem:[%s471 + $0x120] sm:$0xff]
      %v497 = vld [vmem:[%s471 + $0x128] sm:$0xff]
      %v498 = vld [vmem:[%s471 + $0x138] sm:$0xff]
      %v499 = vld [vmem:[%s471 + $0x140] sm:$0xff]
      %v500 = vld [vmem:[%s471 + $0x150] sm:$0xff]
      %v501 = vld [vmem:[%s471 + $0x158] sm:$0xff]
      %v502 = vld [vmem:[%s471 + $0x168] sm:$0xff]
      %v503 = vld [vmem:[%s471 + $0x170] sm:$0xff]
      %v504 = vlaneseq
      %v505 = vshrl.u32 %v504, 7
      %v506 = vsub.s32 0, %v505
      %v507 = vrot.slane %v470, %v506
      %v508 = vmul.f32 %v472, %v507
      %v509 = vmul.f32 %v473, %v507
      %v510 = vmul.f32 %v474, %v507
      %v511 = vmul.f32 %v475, %v507
      %v512 = vmul.f32 %v476, %v507
      %v513 = vmul.f32 %v477, %v507
      %v514 = vmul.f32 %v478, %v507
      %v515 = vmul.f32 %v479, %v507
      %v516 = vmul.f32 %v480, %v507
      %v517 = vmul.f32 %v481, %v507
      %v518 = vmul.f32 %v482, %v507
      %v519 = vmul.f32 %v483, %v507
      %v520 = vmul.f32 %v484, %v507
      %v521 = vmul.f32 %v485, %v507
      %v522 = vmul.f32 %v486, %v507
      %v523 = vmul.f32 %v487, %v507
      %v524 = vmul.f32 %v488, %v507
      %v525 = vmul.f32 %v489, %v507
      %v526 = vmul.f32 %v490, %v507
      %v527 = vmul.f32 %v491, %v507
      %v528 = vmul.f32 %v492, %v507
      %v529 = vmul.f32 %v493, %v507
      %v530 = vmul.f32 %v494, %v507
      %v531 = vmul.f32 %v495, %v507
      %v532 = vmul.f32 %v496, %v507
      %v533 = vmul.f32 %v497, %v507
      %v534 = vmul.f32 %v498, %v507
      %v535 = vmul.f32 %v499, %v507
      %v536 = vmul.f32 %v500, %v507
      %v537 = vmul.f32 %v501, %v507
      %v538 = vmul.f32 %v502, %v507
      %v539 = vmul.f32 %v503, %v507
      %v540 = vadd.f32 %v437, %v508
      %v541 = vadd.f32 %v438, %v509
      %v542 = vadd.f32 %v439, %v510
      %v543 = vadd.f32 %v440, %v511
      %v544 = vadd.f32 %v441, %v512
      %v545 = vadd.f32 %v442, %v513
      %v546 = vadd.f32 %v443, %v514
      %v547 = vadd.f32 %v444, %v515
      %v548 = vadd.f32 %v445, %v516
      %v549 = vadd.f32 %v446, %v517
      %v550 = vadd.f32 %v447, %v518
      %v551 = vadd.f32 %v448, %v519
      %v552 = vadd.f32 %v449, %v520
      %v553 = vadd.f32 %v450, %v521
      %v554 = vadd.f32 %v451, %v522
      %v555 = vadd.f32 %v452, %v523
      %v556 = vadd.f32 %v453, %v524
      %v557 = vadd.f32 %v454, %v525
      %v558 = vadd.f32 %v455, %v526
      %v559 = vadd.f32 %v456, %v527
      %v560 = vadd.f32 %v457, %v528
      %v561 = vadd.f32 %v458, %v529
      %v562 = vadd.f32 %v459, %v530
      %v563 = vadd.f32 %v460, %v531
      %v564 = vadd.f32 %v461, %v532
      %v565 = vadd.f32 %v462, %v533
      %v566 = vadd.f32 %v463, %v534
      %v567 = vadd.f32 %v464, %v535
      %v568 = vadd.f32 %v465, %v536
      %v569 = vadd.f32 %v466, %v537
      %v570 = vadd.f32 %v467, %v538
      %v571 = vadd.f32 %v468, %v539
      %v572 = vld [vmem:[%s469 + $0x1] sm:$0x1]
      %v573 = vld [vmem:[%s471 + $0x1] sm:$0xff]
      %v574 = vld [vmem:[%s471 + $0x9] sm:$0xff]
      %v575 = vld [vmem:[%s471 + $0x19] sm:$0xff]
      %v576 = vld [vmem:[%s471 + $0x21] sm:$0xff]
      %v577 = vld [vmem:[%s471 + $0x31] sm:$0xff]
      %v578 = vld [vmem:[%s471 + $0x39] sm:$0xff]
      %v579 = vld [vmem:[%s471 + $0x49] sm:$0xff]
      %v580 = vld [vmem:[%s471 + $0x51] sm:$0xff]
      %v581 = vld [vmem:[%s471 + $0x61] sm:$0xff]
      %v582 = vld [vmem:[%s471 + $0x69] sm:$0xff]
      %v583 = vld [vmem:[%s471 + $0x79] sm:$0xff]
      %v584 = vld [vmem:[%s471 + $0x81] sm:$0xff]
      %v585 = vld [vmem:[%s471 + $0x91] sm:$0xff]
      %v586 = vld [vmem:[%s471 + $0x99] sm:$0xff]
      %v587 = vld [vmem:[%s471 + $0xa9] sm:$0xff]
      %v588 = vld [vmem:[%s471 + $0xb1] sm:$0xff]
      %v589 = vld [vmem:[%s471 + $0xc1] sm:$0xff]
      %v590 = vld [vmem:[%s471 + $0xc9] sm:$0xff]
      %v591 = vld [vmem:[%s471 + $0xd9] sm:$0xff]
      %v592 = vld [vmem:[%s471 + $0xe1] sm:$0xff]
      %v593 = vld [vmem:[%s471 + $0xf1] sm:$0xff]
      %v594 = vld [vmem:[%s471 + $0xf9] sm:$0xff]
      %v595 = vld [vmem:[%s471 + $0x109] sm:$0xff]
      %v596 = vld [vmem:[%s471 + $0x111] sm:$0xff]
      %v597 = vld [vmem:[%s471 + $0x121] sm:$0xff]
      %v598 = vld [vmem:[%s471 + $0x129] sm:$0xff]
      %v599 = vld [vmem:[%s471 + $0x139] sm:$0xff]
      %v600 = vld [vmem:[%s471 + $0x141] sm:$0xff]
      %v601 = vld [vmem:[%s471 + $0x151] sm:$0xff]
      %v602 = vld [vmem:[%s471 + $0x159] sm:$0xff]
      %v603 = vld [vmem:[%s471 + $0x169] sm:$0xff]
      %v604 = vld [vmem:[%s471 + $0x171] sm:$0xff]
      %v605 = vlaneseq
      %v606 = vshrl.u32 %v605, 7
      %v607 = vsub.s32 0, %v606
      %v608 = vrot.slane %v572, %v607
      %v609 = vmul.f32 %v573, %v608
      %v610 = vmul.f32 %v574, %v608
      %v611 = vmul.f32 %v575, %v608
      %v612 = vmul.f32 %v576, %v608
      %v613 = vmul.f32 %v577, %v608
      %v614 = vmul.f32 %v578, %v608
      %v615 = vmul.f32 %v579, %v608
      %v616 = vmul.f32 %v580, %v608
      %v617 = vmul.f32 %v581, %v608
      %v618 = vmul.f32 %v582, %v608
      %v619 = vmul.f32 %v583, %v608
      %v620 = vmul.f32 %v584, %v608
      %v621 = vmul.f32 %v585, %v608
      %v622 = vmul.f32 %v586, %v608
      %v623 = vmul.f32 %v587, %v608
      %v624 = vmul.f32 %v588, %v608
      %v625 = vmul.f32 %v589, %v608
      %v626 = vmul.f32 %v590, %v608
      %v627 = vmul.f32 %v591, %v608
      %v628 = vmul.f32 %v592, %v608
      %v629 = vmul.f32 %v593, %v608
      %v630 = vmul.f32 %v594, %v608
      %v631 = vmul.f32 %v595, %v608
      %v632 = vmul.f32 %v596, %v608
      %v633 = vmul.f32 %v597, %v608
      %v634 = vmul.f32 %v598, %v608
      %v635 = vmul.f32 %v599, %v608
      %v636 = vmul.f32 %v600, %v608
      %v637 = vmul.f32 %v601, %v608
      %v638 = vmul.f32 %v602, %v608
      %v639 = vmul.f32 %v603, %v608
      %v640 = vmul.f32 %v604, %v608
      %v641 = vadd.f32 %v540, %v609
      %v642 = vadd.f32 %v541, %v610
      %v643 = vadd.f32 %v542, %v611
      %v644 = vadd.f32 %v543, %v612
      %v645 = vadd.f32 %v544, %v613
      %v646 = vadd.f32 %v545, %v614
      %v647 = vadd.f32 %v546, %v615
      %v648 = vadd.f32 %v547, %v616
      %v649 = vadd.f32 %v548, %v617
      %v650 = vadd.f32 %v549, %v618
      %v651 = vadd.f32 %v550, %v619
      %v652 = vadd.f32 %v551, %v620
      %v653 = vadd.f32 %v552, %v621
      %v654 = vadd.f32 %v553, %v622
      %v655 = vadd.f32 %v554, %v623
      %v656 = vadd.f32 %v555, %v624
      %v657 = vadd.f32 %v556, %v625
      %v658 = vadd.f32 %v557, %v626
      %v659 = vadd.f32 %v558, %v627
      %v660 = vadd.f32 %v559, %v628
      %v661 = vadd.f32 %v560, %v629
      %v662 = vadd.f32 %v561, %v630
      %v663 = vadd.f32 %v562, %v631
      %v664 = vadd.f32 %v563, %v632
      %v665 = vadd.f32 %v564, %v633
      %v666 = vadd.f32 %v565, %v634
      %v667 = vadd.f32 %v566, %v635
      %v668 = vadd.f32 %v567, %v636
      %v669 = vadd.f32 %v568, %v637
      %v670 = vadd.f32 %v569, %v638
      %v671 = vadd.f32 %v570, %v639
      %v672 = vadd.f32 %v571, %v640
      %v673 = vld [vmem:[%s469 + $0x2] sm:$0x1]
      %v674 = vld [vmem:[%s471 + $0x2] sm:$0xff]
      %v675 = vld [vmem:[%s471 + $0xa] sm:$0xff]
      %v676 = vld [vmem:[%s471 + $0x1a] sm:$0xff]
      %v677 = vld [vmem:[%s471 + $0x22] sm:$0xff]
      %v678 = vld [vmem:[%s471 + $0x32] sm:$0xff]
      %v679 = vld [vmem:[%s471 + $0x3a] sm:$0xff]
      %v680 = vld [vmem:[%s471 + $0x4a] sm:$0xff]
      %v681 = vld [vmem:[%s471 + $0x52] sm:$0xff]
      %v682 = vld [vmem:[%s471 + $0x62] sm:$0xff]
      %v683 = vld [vmem:[%s471 + $0x6a] sm:$0xff]
      %v684 = vld [vmem:[%s471 + $0x7a] sm:$0xff]
      %v685 = vld [vmem:[%s471 + $0x82] sm:$0xff]
      %v686 = vld [vmem:[%s471 + $0x92] sm:$0xff]
      %v687 = vld [vmem:[%s471 + $0x9a] sm:$0xff]
      %v688 = vld [vmem:[%s471 + $0xaa] sm:$0xff]
      %v689 = vld [vmem:[%s471 + $0xb2] sm:$0xff]
      %v690 = vld [vmem:[%s471 + $0xc2] sm:$0xff]
      %v691 = vld [vmem:[%s471 + $0xca] sm:$0xff]
      %v692 = vld [vmem:[%s471 + $0xda] sm:$0xff]
      %v693 = vld [vmem:[%s471 + $0xe2] sm:$0xff]
      %v694 = vld [vmem:[%s471 + $0xf2] sm:$0xff]
      %v695 = vld [vmem:[%s471 + $0xfa] sm:$0xff]
      %v696 = vld [vmem:[%s471 + $0x10a] sm:$0xff]
      %v697 = vld [vmem:[%s471 + $0x112] sm:$0xff]
      %v698 = vld [vmem:[%s471 + $0x122] sm:$0xff]
      %v699 = vld [vmem:[%s471 + $0x12a] sm:$0xff]
      %v700 = vld [vmem:[%s471 + $0x13a] sm:$0xff]
      %v701 = vld [vmem:[%s471 + $0x142] sm:$0xff]
      %v702 = vld [vmem:[%s471 + $0x152] sm:$0xff]
      %v703 = vld [vmem:[%s471 + $0x15a] sm:$0xff]
      %v704 = vld [vmem:[%s471 + $0x16a] sm:$0xff]
      %v705 = vld [vmem:[%s471 + $0x172] sm:$0xff]
      %v706 = vlaneseq
      %v707 = vshrl.u32 %v706, 7
      %v708 = vsub.s32 0, %v707
      %v709 = vrot.slane %v673, %v708
      %v710 = vmul.f32 %v674, %v709
      %v711 = vmul.f32 %v675, %v709
      %v712 = vmul.f32 %v676, %v709
      %v713 = vmul.f32 %v677, %v709
      %v714 = vmul.f32 %v678, %v709
      %v715 = vmul.f32 %v679, %v709
      %v716 = vmul.f32 %v680, %v709
      %v717 = vmul.f32 %v681, %v709
      %v718 = vmul.f32 %v682, %v709
      %v719 = vmul.f32 %v683, %v709
      %v720 = vmul.f32 %v684, %v709
      %v721 = vmul.f32 %v685, %v709
      %v722 = vmul.f32 %v686, %v709
      %v723 = vmul.f32 %v687, %v709
      %v724 = vmul.f32 %v688, %v709
      %v725 = vmul.f32 %v689, %v709
      %v726 = vmul.f32 %v690, %v709
      %v727 = vmul.f32 %v691, %v709
      %v728 = vmul.f32 %v692, %v709
      %v729 = vmul.f32 %v693, %v709
      %v730 = vmul.f32 %v694, %v709
      %v731 = vmul.f32 %v695, %v709
      %v732 = vmul.f32 %v696, %v709
      %v733 = vmul.f32 %v697, %v709
      %v734 = vmul.f32 %v698, %v709
      %v735 = vmul.f32 %v699, %v709
      %v736 = vmul.f32 %v700, %v709
      %v737 = vmul.f32 %v701, %v709
      %v738 = vmul.f32 %v702, %v709
      %v739 = vmul.f32 %v703, %v709
      %v740 = vmul.f32 %v704, %v709
      %v741 = vmul.f32 %v705, %v709
      %v742 = vadd.f32 %v641, %v710
      %v743 = vadd.f32 %v642, %v711
      %v744 = vadd.f32 %v643, %v712
      %v745 = vadd.f32 %v644, %v713
      %v746 = vadd.f32 %v645, %v714
      %v747 = vadd.f32 %v646, %v715
      %v748 = vadd.f32 %v647, %v716
      %v749 = vadd.f32 %v648, %v717
      %v750 = vadd.f32 %v649, %v718
      %v751 = vadd.f32 %v650, %v719
      %v752 = vadd.f32 %v651, %v720
      %v753 = vadd.f32 %v652, %v721
      %v754 = vadd.f32 %v653, %v722
      %v755 = vadd.f32 %v654, %v723
      %v756 = vadd.f32 %v655, %v724
      %v757 = vadd.f32 %v656, %v725
      %v758 = vadd.f32 %v657, %v726
      %v759 = vadd.f32 %v658, %v727
      %v760 = vadd.f32 %v659, %v728
      %v761 = vadd.f32 %v660, %v729
      %v762 = vadd.f32 %v661, %v730
      %v763 = vadd.f32 %v662, %v731
      %v764 = vadd.f32 %v663, %v732
      %v765 = vadd.f32 %v664, %v733
      %v766 = vadd.f32 %v665, %v734
      %v767 = vadd.f32 %v666, %v735
      %v768 = vadd.f32 %v667, %v736
      %v769 = vadd.f32 %v668, %v737
      %v770 = vadd.f32 %v669, %v738
      %v771 = vadd.f32 %v670, %v739
      %v772 = vadd.f32 %v671, %v740
      %v773 = vadd.f32 %v672, %v741
      %s774 = scalar_lea.vmem %s1, 8
      %v775 = vld [vmem:[%s774] sm:$0x1]
      %s776 = scalar_lea.vmem %s192, 48
      %v777 = vld [vmem:[%s776] sm:$0xff]
      %v778 = vld [vmem:[%s776 + $0x8] sm:$0xff]
      %v779 = vld [vmem:[%s776 + $0x18] sm:$0xff]
      %v780 = vld [vmem:[%s776 + $0x20] sm:$0xff]
      %v781 = vld [vmem:[%s776 + $0x30] sm:$0xff]
      %v782 = vld [vmem:[%s776 + $0x38] sm:$0xff]
      %v783 = vld [vmem:[%s776 + $0x48] sm:$0xff]
      %v784 = vld [vmem:[%s776 + $0x50] sm:$0xff]
      %v785 = vld [vmem:[%s776 + $0x60] sm:$0xff]
      %v786 = vld [vmem:[%s776 + $0x68] sm:$0xff]
      %v787 = vld [vmem:[%s776 + $0x78] sm:$0xff]
      %v788 = vld [vmem:[%s776 + $0x80] sm:$0xff]
      %v789 = vld [vmem:[%s776 + $0x90] sm:$0xff]
      %v790 = vld [vmem:[%s776 + $0x98] sm:$0xff]
      %v791 = vld [vmem:[%s776 + $0xa8] sm:$0xff]
      %v792 = vld [vmem:[%s776 + $0xb0] sm:$0xff]
      %v793 = vld [vmem:[%s776 + $0xc0] sm:$0xff]
      %v794 = vld [vmem:[%s776 + $0xc8] sm:$0xff]
      %v795 = vld [vmem:[%s776 + $0xd8] sm:$0xff]
      %v796 = vld [vmem:[%s776 + $0xe0] sm:$0xff]
      %v797 = vld [vmem:[%s776 + $0xf0] sm:$0xff]
      %v798 = vld [vmem:[%s776 + $0xf8] sm:$0xff]
      %v799 = vld [vmem:[%s776 + $0x108] sm:$0xff]
      %v800 = vld [vmem:[%s776 + $0x110] sm:$0xff]
      %v801 = vld [vmem:[%s776 + $0x120] sm:$0xff]
      %v802 = vld [vmem:[%s776 + $0x128] sm:$0xff]
      %v803 = vld [vmem:[%s776 + $0x138] sm:$0xff]
      %v804 = vld [vmem:[%s776 + $0x140] sm:$0xff]
      %v805 = vld [vmem:[%s776 + $0x150] sm:$0xff]
      %v806 = vld [vmem:[%s776 + $0x158] sm:$0xff]
      %v807 = vld [vmem:[%s776 + $0x168] sm:$0xff]
      %v808 = vld [vmem:[%s776 + $0x170] sm:$0xff]
      %v809 = vlaneseq
      %v810 = vshrl.u32 %v809, 7
      %v811 = vsub.s32 0, %v810
      %v812 = vrot.slane %v775, %v811
      %v813 = vmul.f32 %v777, %v812
      %v814 = vmul.f32 %v778, %v812
      %v815 = vmul.f32 %v779, %v812
      %v816 = vmul.f32 %v780, %v812
      %v817 = vmul.f32 %v781, %v812
      %v818 = vmul.f32 %v782, %v812
      %v819 = vmul.f32 %v783, %v812
      %v820 = vmul.f32 %v784, %v812
      %v821 = vmul.f32 %v785, %v812
      %v822 = vmul.f32 %v786, %v812
      %v823 = vmul.f32 %v787, %v812
      %v824 = vmul.f32 %v788, %v812
      %v825 = vmul.f32 %v789, %v812
      %v826 = vmul.f32 %v790, %v812
      %v827 = vmul.f32 %v791, %v812
      %v828 = vmul.f32 %v792, %v812
      %v829 = vmul.f32 %v793, %v812
      %v830 = vmul.f32 %v794, %v812
      %v831 = vmul.f32 %v795, %v812
      %v832 = vmul.f32 %v796, %v812
      %v833 = vmul.f32 %v797, %v812
      %v834 = vmul.f32 %v798, %v812
      %v835 = vmul.f32 %v799, %v812
      %v836 = vmul.f32 %v800, %v812
      %v837 = vmul.f32 %v801, %v812
      %v838 = vmul.f32 %v802, %v812
      %v839 = vmul.f32 %v803, %v812
      %v840 = vmul.f32 %v804, %v812
      %v841 = vmul.f32 %v805, %v812
      %v842 = vmul.f32 %v806, %v812
      %v843 = vmul.f32 %v807, %v812
      %v844 = vmul.f32 %v808, %v812
      %v845 = vadd.f32 %v742, %v813
      %v846 = vadd.f32 %v743, %v814
      %v847 = vadd.f32 %v744, %v815
      %v848 = vadd.f32 %v745, %v816
      %v849 = vadd.f32 %v746, %v817
      %v850 = vadd.f32 %v747, %v818
      %v851 = vadd.f32 %v748, %v819
      %v852 = vadd.f32 %v749, %v820
      %v853 = vadd.f32 %v750, %v821
      %v854 = vadd.f32 %v751, %v822
      %v855 = vadd.f32 %v752, %v823
      %v856 = vadd.f32 %v753, %v824
      %v857 = vadd.f32 %v754, %v825
      %v858 = vadd.f32 %v755, %v826
      %v859 = vadd.f32 %v756, %v827
      %v860 = vadd.f32 %v757, %v828
      %v861 = vadd.f32 %v758, %v829
      %v862 = vadd.f32 %v759, %v830
      %v863 = vadd.f32 %v760, %v831
      %v864 = vadd.f32 %v761, %v832
      %v865 = vadd.f32 %v762, %v833
      %v866 = vadd.f32 %v763, %v834
      %v867 = vadd.f32 %v764, %v835
      %v868 = vadd.f32 %v765, %v836
      %v869 = vadd.f32 %v766, %v837
      %v870 = vadd.f32 %v767, %v838
      %v871 = vadd.f32 %v768, %v839
      %v872 = vadd.f32 %v769, %v840
      %v873 = vadd.f32 %v770, %v841
      %v874 = vadd.f32 %v771, %v842
      %v875 = vadd.f32 %v772, %v843
      %v876 = vadd.f32 %v773, %v844
      %v877 = vld [vmem:[%s774 + $0x1] sm:$0x1]
      %v878 = vld [vmem:[%s776 + $0x1] sm:$0xff]
      %v879 = vld [vmem:[%s776 + $0x9] sm:$0xff]
      %v880 = vld [vmem:[%s776 + $0x19] sm:$0xff]
      %v881 = vld [vmem:[%s776 + $0x21] sm:$0xff]
      %v882 = vld [vmem:[%s776 + $0x31] sm:$0xff]
      %v883 = vld [vmem:[%s776 + $0x39] sm:$0xff]
      %v884 = vld [vmem:[%s776 + $0x49] sm:$0xff]
      %v885 = vld [vmem:[%s776 + $0x51] sm:$0xff]
      %v886 = vld [vmem:[%s776 + $0x61] sm:$0xff]
      %v887 = vld [vmem:[%s776 + $0x69] sm:$0xff]
      %v888 = vld [vmem:[%s776 + $0x79] sm:$0xff]
      %v889 = vld [vmem:[%s776 + $0x81] sm:$0xff]
      %v890 = vld [vmem:[%s776 + $0x91] sm:$0xff]
      %v891 = vld [vmem:[%s776 + $0x99] sm:$0xff]
      %v892 = vld [vmem:[%s776 + $0xa9] sm:$0xff]
      %v893 = vld [vmem:[%s776 + $0xb1] sm:$0xff]
      %v894 = vld [vmem:[%s776 + $0xc1] sm:$0xff]
      %v895 = vld [vmem:[%s776 + $0xc9] sm:$0xff]
      %v896 = vld [vmem:[%s776 + $0xd9] sm:$0xff]
      %v897 = vld [vmem:[%s776 + $0xe1] sm:$0xff]
      %v898 = vld [vmem:[%s776 + $0xf1] sm:$0xff]
      %v899 = vld [vmem:[%s776 + $0xf9] sm:$0xff]
      %v900 = vld [vmem:[%s776 + $0x109] sm:$0xff]
      %v901 = vld [vmem:[%s776 + $0x111] sm:$0xff]
      %v902 = vld [vmem:[%s776 + $0x121] sm:$0xff]
      %v903 = vld [vmem:[%s776 + $0x129] sm:$0xff]
      %v904 = vld [vmem:[%s776 + $0x139] sm:$0xff]
      %v905 = vld [vmem:[%s776 + $0x141] sm:$0xff]
      %v906 = vld [vmem:[%s776 + $0x151] sm:$0xff]
      %v907 = vld [vmem:[%s776 + $0x159] sm:$0xff]
      %v908 = vld [vmem:[%s776 + $0x169] sm:$0xff]
      %v909 = vld [vmem:[%s776 + $0x171] sm:$0xff]
      %v910 = vlaneseq
      %v911 = vshrl.u32 %v910, 7
      %v912 = vsub.s32 0, %v911
      %v913 = vrot.slane %v877, %v912
      %v914 = vmul.f32 %v878, %v913
      %v915 = vmul.f32 %v879, %v913
      %v916 = vmul.f32 %v880, %v913
      %v917 = vmul.f32 %v881, %v913
      %v918 = vmul.f32 %v882, %v913
      %v919 = vmul.f32 %v883, %v913
      %v920 = vmul.f32 %v884, %v913
      %v921 = vmul.f32 %v885, %v913
      %v922 = vmul.f32 %v886, %v913
      %v923 = vmul.f32 %v887, %v913
      %v924 = vmul.f32 %v888, %v913
      %v925 = vmul.f32 %v889, %v913
      %v926 = vmul.f32 %v890, %v913
      %v927 = vmul.f32 %v891, %v913
      %v928 = vmul.f32 %v892, %v913
      %v929 = vmul.f32 %v893, %v913
      %v930 = vmul.f32 %v894, %v913
      %v931 = vmul.f32 %v895, %v913
      %v932 = vmul.f32 %v896, %v913
      %v933 = vmul.f32 %v897, %v913
      %v934 = vmul.f32 %v898, %v913
      %v935 = vmul.f32 %v899, %v913
      %v936 = vmul.f32 %v900, %v913
      %v937 = vmul.f32 %v901, %v913
      %v938 = vmul.f32 %v902, %v913
      %v939 = vmul.f32 %v903, %v913
      %v940 = vmul.f32 %v904, %v913
      %v941 = vmul.f32 %v905, %v913
      %v942 = vmul.f32 %v906, %v913
      %v943 = vmul.f32 %v907, %v913
      %v944 = vmul.f32 %v908, %v913
      %v945 = vmul.f32 %v909, %v913
      %v946 = vadd.f32 %v845, %v914
      %v947 = vadd.f32 %v846, %v915
      %v948 = vadd.f32 %v847, %v916
      %v949 = vadd.f32 %v848, %v917
      %v950 = vadd.f32 %v849, %v918
      %v951 = vadd.f32 %v850, %v919
      %v952 = vadd.f32 %v851, %v920
      %v953 = vadd.f32 %v852, %v921
      %v954 = vadd.f32 %v853, %v922
      %v955 = vadd.f32 %v854, %v923
      %v956 = vadd.f32 %v855, %v924
      %v957 = vadd.f32 %v856, %v925
      %v958 = vadd.f32 %v857, %v926
      %v959 = vadd.f32 %v858, %v927
      %v960 = vadd.f32 %v859, %v928
      %v961 = vadd.f32 %v860, %v929
      %v962 = vadd.f32 %v861, %v930
      %v963 = vadd.f32 %v862, %v931
      %v964 = vadd.f32 %v863, %v932
      %v965 = vadd.f32 %v864, %v933
      %v966 = vadd.f32 %v865, %v934
      %v967 = vadd.f32 %v866, %v935
      %v968 = vadd.f32 %v867, %v936
      %v969 = vadd.f32 %v868, %v937
      %v970 = vadd.f32 %v869, %v938
      %v971 = vadd.f32 %v870, %v939
      %v972 = vadd.f32 %v871, %v940
      %v973 = vadd.f32 %v872, %v941
      %v974 = vadd.f32 %v873, %v942
      %v975 = vadd.f32 %v874, %v943
      %v976 = vadd.f32 %v875, %v944
      %v977 = vadd.f32 %v876, %v945
      %v978 = vld [vmem:[%s774 + $0x2] sm:$0x1]
      %v979 = vld [vmem:[%s776 + $0x2] sm:$0xff]
      %v980 = vld [vmem:[%s776 + $0xa] sm:$0xff]
      %v981 = vld [vmem:[%s776 + $0x1a] sm:$0xff]
      %v982 = vld [vmem:[%s776 + $0x22] sm:$0xff]
      %v983 = vld [vmem:[%s776 + $0x32] sm:$0xff]
      %v984 = vld [vmem:[%s776 + $0x3a] sm:$0xff]
      %v985 = vld [vmem:[%s776 + $0x4a] sm:$0xff]
      %v986 = vld [vmem:[%s776 + $0x52] sm:$0xff]
      %v987 = vld [vmem:[%s776 + $0x62] sm:$0xff]
      %v988 = vld [vmem:[%s776 + $0x6a] sm:$0xff]
      %v989 = vld [vmem:[%s776 + $0x7a] sm:$0xff]
      %v990 = vld [vmem:[%s776 + $0x82] sm:$0xff]
      %v991 = vld [vmem:[%s776 + $0x92] sm:$0xff]
      %v992 = vld [vmem:[%s776 + $0x9a] sm:$0xff]
      %v993 = vld [vmem:[%s776 + $0xaa] sm:$0xff]
      %v994 = vld [vmem:[%s776 + $0xb2] sm:$0xff]
      %v995 = vld [vmem:[%s776 + $0xc2] sm:$0xff]
      %v996 = vld [vmem:[%s776 + $0xca] sm:$0xff]
      %v997 = vld [vmem:[%s776 + $0xda] sm:$0xff]
      %v998 = vld [vmem:[%s776 + $0xe2] sm:$0xff]
      %v999 = vld [vmem:[%s776 + $0xf2] sm:$0xff]
      %v1000 = vld [vmem:[%s776 + $0xfa] sm:$0xff]
      %v1001 = vld [vmem:[%s776 + $0x10a] sm:$0xff]
      %v1002 = vld [vmem:[%s776 + $0x112] sm:$0xff]
      %v1003 = vld [vmem:[%s776 + $0x122] sm:$0xff]
      %v1004 = vld [vmem:[%s776 + $0x12a] sm:$0xff]
      %v1005 = vld [vmem:[%s776 + $0x13a] sm:$0xff]
      %v1006 = vld [vmem:[%s776 + $0x142] sm:$0xff]
      %v1007 = vld [vmem:[%s776 + $0x152] sm:$0xff]
      %v1008 = vld [vmem:[%s776 + $0x15a] sm:$0xff]
      %v1009 = vld [vmem:[%s776 + $0x16a] sm:$0xff]
      %v1010 = vld [vmem:[%s776 + $0x172] sm:$0xff]
      %v1011 = vlaneseq
      %v1012 = vshrl.u32 %v1011, 7
      %v1013 = vsub.s32 0, %v1012
      %v1014 = vrot.slane %v978, %v1013
      %v1015 = vmul.f32 %v979, %v1014
      %v1016 = vmul.f32 %v980, %v1014
      %v1017 = vmul.f32 %v981, %v1014
      %v1018 = vmul.f32 %v982, %v1014
      %v1019 = vmul.f32 %v983, %v1014
      %v1020 = vmul.f32 %v984, %v1014
      %v1021 = vmul.f32 %v985, %v1014
      %v1022 = vmul.f32 %v986, %v1014
      %v1023 = vmul.f32 %v987, %v1014
      %v1024 = vmul.f32 %v988, %v1014
      %v1025 = vmul.f32 %v989, %v1014
      %v1026 = vmul.f32 %v990, %v1014
      %v1027 = vmul.f32 %v991, %v1014
      %v1028 = vmul.f32 %v992, %v1014
      %v1029 = vmul.f32 %v993, %v1014
      %v1030 = vmul.f32 %v994, %v1014
      %v1031 = vmul.f32 %v995, %v1014
      %v1032 = vmul.f32 %v996, %v1014
      %v1033 = vmul.f32 %v997, %v1014
      %v1034 = vmul.f32 %v998, %v1014
      %v1035 = vmul.f32 %v999, %v1014
      %v1036 = vmul.f32 %v1000, %v1014
      %v1037 = vmul.f32 %v1001, %v1014
      %v1038 = vmul.f32 %v1002, %v1014
      %v1039 = vmul.f32 %v1003, %v1014
      %v1040 = vmul.f32 %v1004, %v1014
      %v1041 = vmul.f32 %v1005, %v1014
      %v1042 = vmul.f32 %v1006, %v1014
      %v1043 = vmul.f32 %v1007, %v1014
      %v1044 = vmul.f32 %v1008, %v1014
      %v1045 = vmul.f32 %v1009, %v1014
      %v1046 = vmul.f32 %v1010, %v1014
      %v1047 = vadd.f32 %v946, %v1015
      %v1048 = vadd.f32 %v947, %v1016
      %v1049 = vadd.f32 %v948, %v1017
      %v1050 = vadd.f32 %v949, %v1018
      %v1051 = vadd.f32 %v950, %v1019
      %v1052 = vadd.f32 %v951, %v1020
      %v1053 = vadd.f32 %v952, %v1021
      %v1054 = vadd.f32 %v953, %v1022
      %v1055 = vadd.f32 %v954, %v1023
      %v1056 = vadd.f32 %v955, %v1024
      %v1057 = vadd.f32 %v956, %v1025
      %v1058 = vadd.f32 %v957, %v1026
      %v1059 = vadd.f32 %v958, %v1027
      %v1060 = vadd.f32 %v959, %v1028
      %v1061 = vadd.f32 %v960, %v1029
      %v1062 = vadd.f32 %v961, %v1030
      %v1063 = vadd.f32 %v962, %v1031
      %v1064 = vadd.f32 %v963, %v1032
      %v1065 = vadd.f32 %v964, %v1033
      %v1066 = vadd.f32 %v965, %v1034
      %v1067 = vadd.f32 %v966, %v1035
      %v1068 = vadd.f32 %v967, %v1036
      %v1069 = vadd.f32 %v968, %v1037
      %v1070 = vadd.f32 %v969, %v1038
      %v1071 = vadd.f32 %v970, %v1039
      %v1072 = vadd.f32 %v971, %v1040
      %v1073 = vadd.f32 %v972, %v1041
      %v1074 = vadd.f32 %v973, %v1042
      %v1075 = vadd.f32 %v974, %v1043
      %v1076 = vadd.f32 %v975, %v1044
      %v1077 = vadd.f32 %v976, %v1045
      %v1078 = vadd.f32 %v977, %v1046
      %v1079 = vld [vmem:[%s2] sm:$0xf]
      %v1080 = vld [vmem:[%s3] sm:$0x1]
      %v1082 = vlaneseq
      %v1083 = vshrl.u32 %v1082, 7
      %v1084 = vsub.s32 0, %v1083
      %v1085 = vrot.slane %v1080, %v1084
      %vm1087 = vcmask 31744
      %v1089 = vsel %vm1087, %v1047, 0
      %v1092 = vsel %vm1087, %v1048, 0
      %v1095 = vsel %vm1087, %v1049, 0
      %v1098 = vsel %vm1087, %v1050, 0
      %v1101 = vsel %vm1087, %v1051, 0
      %v1104 = vsel %vm1087, %v1052, 0
      %v1107 = vsel %vm1087, %v1053, 0
      %v1110 = vsel %vm1087, %v1054, 0
      %v1113 = vsel %vm1087, %v1055, 0
      %v1116 = vsel %vm1087, %v1056, 0
      %v1119 = vsel %vm1087, %v1057, 0
      %v1122 = vsel %vm1087, %v1058, 0
      %v1125 = vsel %vm1087, %v1059, 0
      %v1128 = vsel %vm1087, %v1060, 0
      %v1131 = vsel %vm1087, %v1061, 0
      %v1134 = vsel %vm1087, %v1062, 0
      %v1137 = vsel %vm1087, %v1063, 0
      %v1140 = vsel %vm1087, %v1064, 0
      %v1143 = vsel %vm1087, %v1065, 0
      %v1146 = vsel %vm1087, %v1066, 0
      %v1149 = vsel %vm1087, %v1067, 0
      %v1152 = vsel %vm1087, %v1068, 0
      %v1155 = vsel %vm1087, %v1069, 0
      %v1158 = vsel %vm1087, %v1070, 0
      %v1161 = vsel %vm1087, %v1071, 0
      %v1164 = vsel %vm1087, %v1072, 0
      %v1167 = vsel %vm1087, %v1073, 0
      %v1170 = vsel %vm1087, %v1074, 0
      %v1173 = vsel %vm1087, %v1075, 0
      %v1176 = vsel %vm1087, %v1076, 0
      %v1179 = vsel %vm1087, %v1077, 0
      %v1182 = vsel %vm1087, %v1078, 0
      %vm1184 = vcmask 1043456
      %v1186 = vsel %vm1184, %v1079, 0
      %1188 = vmatprep.subr.mxu0 0.0
      %1189 = vmatpush1.msra.mxu0 0.0
      %1190 = vmatprep.subr.mxu0 0.0
      %1191 = vmatpush1.msra.mxu0 0.0
      %1192 = vmatprep.subr.mxu0 0.0
      %1193 = vmatpush1.msra.mxu0 0.0
      %1194 = vmatprep.subr.mxu0 0.0
      %1195 = vmatpush1.msra.mxu0 0.0
      %1196 = vmatprep.subr.mxu0 0.0
      %1197 = vmatpush1.msra.mxu0 0.0
      %1198 = vmatprep.subr.mxu0 0.0
      %1199 = vmatpush1.msra.mxu0 0.0
      %1200 = vmatprep.subr.mxu0 0.0
      %1201 = vmatpush1.msra.mxu0 0.0
      %1202 = vmatprep.subr.mxu0 0.0
      %1203 = vmatpush1.msra.mxu0 0.0
      %1204 = vmatprep.subr.mxu0 0.0
      %1205 = vmatpush1.msra.mxu0 0.0
      %1206 = vmatprep.subr.mxu0 0.0
      %1207 = vmatpush1.msra.mxu0 0.0
      %1208 = vmatprep.subr.mxu0 0.0
      %1209 = vmatpush1.msra.mxu0 0.0
      %1210 = vmatprep.subr.mxu0 0.0
      %1211 = vmatpush1.msra.mxu0 0.0
      %1212 = vmatprep.subr.mxu0 0.0
      %1213 = vmatpush1.msra.mxu0 0.0
      %1214 = vmatprep.subr.mxu0 0.0
      %1215 = vmatpush1.msra.mxu0 0.0
      %1216 = vmatprep.subr.mxu0 0.0
      %1217 = vmatpush1.msra.mxu0 0.0
      %1218 = vmatprep.subr.mxu0 0.0
      %1219 = vmatpush1.msra.mxu0 %v1186
      %1220 = vmatprep.subr.mxu0 0.0
      %1221 = vmatpush2.msra.mxu0 0.0
      %1222 = vmatprep.subr.mxu0 0.0
      %1223 = vmatpush2.msra.mxu0 0.0
      %1224 = vmatprep.subr.mxu0 0.0
      %1225 = vmatpush2.msra.mxu0 0.0
      %1226 = vmatprep.subr.mxu0 0.0
      %1227 = vmatpush2.msra.mxu0 0.0
      %1228 = vmatprep.subr.mxu0 0.0
      %1229 = vmatpush2.msra.mxu0 0.0
      %1230 = vmatprep.subr.mxu0 0.0
      %1231 = vmatpush2.msra.mxu0 0.0
      %1232 = vmatprep.subr.mxu0 0.0
      %1233 = vmatpush2.msra.mxu0 0.0
      %1234 = vmatprep.subr.mxu0 0.0
      %1235 = vmatpush2.msra.mxu0 0.0
      %1236 = vmatprep.subr.mxu0 0.0
      %1237 = vmatpush2.msra.mxu0 0.0
      %1238 = vmatprep.subr.mxu0 0.0
      %1239 = vmatpush2.msra.mxu0 0.0
      %1240 = vmatprep.subr.mxu0 0.0
      %1241 = vmatpush2.msra.mxu0 0.0
      %1242 = vmatprep.subr.mxu0 0.0
      %1243 = vmatpush2.msra.mxu0 0.0
      %1244 = vmatprep.subr.mxu0 0.0
      %1245 = vmatpush2.msra.mxu0 0.0
      %1246 = vmatprep.subr.mxu0 0.0
      %1247 = vmatpush2.msra.mxu0 0.0
      %1248 = vmatprep.subr.mxu0 0.0
      %1249 = vmatpush2.msra.mxu0 0.0
      %1250 = vmatprep.subr.mxu0 0.0
      %1251 = vmatpush2.msra.mxu0 0.0
      %1252 = vmatprep.mubr.f32.mxu0 0.0
      %1253 = vmatmul.mubr.f32.gmra.mxu0 %v1089
      %v1254 = vpop.f32.mrf.mxu0
      %v1255 = vadd.f32 %v1085, %v1254
      %v1256 = vpop.f32.mrf.mxu0
      %1257 = vmatprep.mubr.f32.mxu0 0.0
      %1258 = vmatmul.mubr.f32.gmra.mxu0 %v1092
      %v1259 = vpop.f32.mrf.mxu0
      %v1260 = vadd.f32 %v1085, %v1259
      %v1261 = vpop.f32.mrf.mxu0
      %1262 = vmatprep.mubr.f32.mxu0 0.0
      %1263 = vmatmul.mubr.f32.gmra.mxu0 %v1095
      %v1264 = vpop.f32.mrf.mxu0
      %v1265 = vadd.f32 %v1085, %v1264
      %v1266 = vpop.f32.mrf.mxu0
      %1267 = vmatprep.mubr.f32.mxu0 0.0
      %1268 = vmatmul.mubr.f32.gmra.mxu0 %v1098
      %v1269 = vpop.f32.mrf.mxu0
      %v1270 = vadd.f32 %v1085, %v1269
      %v1271 = vpop.f32.mrf.mxu0
      %1272 = vmatprep.mubr.f32.mxu0 0.0
      %1273 = vmatmul.mubr.f32.gmra.mxu0 %v1101
      %v1274 = vpop.f32.mrf.mxu0
      %v1275 = vadd.f32 %v1085, %v1274
      %v1276 = vpop.f32.mrf.mxu0
      %1277 = vmatprep.mubr.f32.mxu0 0.0
      %1278 = vmatmul.mubr.f32.gmra.mxu0 %v1104
      %v1279 = vpop.f32.mrf.mxu0
      %v1280 = vadd.f32 %v1085, %v1279
      %v1281 = vpop.f32.mrf.mxu0
      %1282 = vmatprep.mubr.f32.mxu0 0.0
      %1283 = vmatmul.mubr.f32.gmra.mxu0 %v1107
      %v1284 = vpop.f32.mrf.mxu0
      %v1285 = vadd.f32 %v1085, %v1284
      %v1286 = vpop.f32.mrf.mxu0
      %1287 = vmatprep.mubr.f32.mxu0 0.0
      %1288 = vmatmul.mubr.f32.gmra.mxu0 %v1110
      %v1289 = vpop.f32.mrf.mxu0
      %v1290 = vadd.f32 %v1085, %v1289
      %v1291 = vpop.f32.mrf.mxu0
      %1292 = vmatprep.mubr.f32.mxu0 0.0
      %1293 = vmatmul.mubr.f32.gmra.mxu0 %v1113
      %v1294 = vpop.f32.mrf.mxu0
      %v1295 = vadd.f32 %v1085, %v1294
      %v1296 = vpop.f32.mrf.mxu0
      %1297 = vmatprep.mubr.f32.mxu0 0.0
      %1298 = vmatmul.mubr.f32.gmra.mxu0 %v1116
      %v1299 = vpop.f32.mrf.mxu0
      %v1300 = vadd.f32 %v1085, %v1299
      %v1301 = vpop.f32.mrf.mxu0
      %1302 = vmatprep.mubr.f32.mxu0 0.0
      %1303 = vmatmul.mubr.f32.gmra.mxu0 %v1119
      %v1304 = vpop.f32.mrf.mxu0
      %v1305 = vadd.f32 %v1085, %v1304
      %v1306 = vpop.f32.mrf.mxu0
      %1307 = vmatprep.mubr.f32.mxu0 0.0
      %1308 = vmatmul.mubr.f32.gmra.mxu0 %v1122
      %v1309 = vpop.f32.mrf.mxu0
      %v1310 = vadd.f32 %v1085, %v1309
      %v1311 = vpop.f32.mrf.mxu0
      %1312 = vmatprep.mubr.f32.mxu0 0.0
      %1313 = vmatmul.mubr.f32.gmra.mxu0 %v1125
      %v1314 = vpop.f32.mrf.mxu0
      %v1315 = vadd.f32 %v1085, %v1314
      %v1316 = vpop.f32.mrf.mxu0
      %1317 = vmatprep.mubr.f32.mxu0 0.0
      %1318 = vmatmul.mubr.f32.gmra.mxu0 %v1128
      %v1319 = vpop.f32.mrf.mxu0
      %v1320 = vadd.f32 %v1085, %v1319
      %v1321 = vpop.f32.mrf.mxu0
      %1322 = vmatprep.mubr.f32.mxu0 0.0
      %1323 = vmatmul.mubr.f32.gmra.mxu0 %v1131
      %v1324 = vpop.f32.mrf.mxu0
      %v1325 = vadd.f32 %v1085, %v1324
      %v1326 = vpop.f32.mrf.mxu0
      %1327 = vmatprep.mubr.f32.mxu0 0.0
      %1328 = vmatmul.mubr.f32.gmra.mxu0 %v1134
      %v1329 = vpop.f32.mrf.mxu0
      %v1330 = vadd.f32 %v1085, %v1329
      %v1331 = vpop.f32.mrf.mxu0
      %1332 = vmatprep.mubr.f32.mxu0 0.0
      %1333 = vmatmul.mubr.f32.gmra.mxu0 %v1137
      %v1334 = vpop.f32.mrf.mxu0
      %v1335 = vadd.f32 %v1085, %v1334
      %v1336 = vpop.f32.mrf.mxu0
      %1337 = vmatprep.mubr.f32.mxu0 0.0
      %1338 = vmatmul.mubr.f32.gmra.mxu0 %v1140
      %v1339 = vpop.f32.mrf.mxu0
      %v1340 = vadd.f32 %v1085, %v1339
      %v1341 = vpop.f32.mrf.mxu0
      %1342 = vmatprep.mubr.f32.mxu0 0.0
      %1343 = vmatmul.mubr.f32.gmra.mxu0 %v1143
      %v1344 = vpop.f32.mrf.mxu0
      %v1345 = vadd.f32 %v1085, %v1344
      %v1346 = vpop.f32.mrf.mxu0
      %1347 = vmatprep.mubr.f32.mxu0 0.0
      %1348 = vmatmul.mubr.f32.gmra.mxu0 %v1146
      %v1349 = vpop.f32.mrf.mxu0
      %v1350 = vadd.f32 %v1085, %v1349
      %v1351 = vpop.f32.mrf.mxu0
      %1352 = vmatprep.mubr.f32.mxu0 0.0
      %1353 = vmatmul.mubr.f32.gmra.mxu0 %v1149
      %v1354 = vpop.f32.mrf.mxu0
      %v1355 = vadd.f32 %v1085, %v1354
      %v1356 = vpop.f32.mrf.mxu0
      %1357 = vmatprep.mubr.f32.mxu0 0.0
      %1358 = vmatmul.mubr.f32.gmra.mxu0 %v1152
      %v1359 = vpop.f32.mrf.mxu0
      %v1360 = vadd.f32 %v1085, %v1359
      %v1361 = vpop.f32.mrf.mxu0
      %1362 = vmatprep.mubr.f32.mxu0 0.0
      %1363 = vmatmul.mubr.f32.gmra.mxu0 %v1155
      %v1364 = vpop.f32.mrf.mxu0
      %v1365 = vadd.f32 %v1085, %v1364
      %v1366 = vpop.f32.mrf.mxu0
      %1367 = vmatprep.mubr.f32.mxu0 0.0
      %1368 = vmatmul.mubr.f32.gmra.mxu0 %v1158
      %v1369 = vpop.f32.mrf.mxu0
      %v1370 = vadd.f32 %v1085, %v1369
      %v1371 = vpop.f32.mrf.mxu0
      %1372 = vmatprep.mubr.f32.mxu0 0.0
      %1373 = vmatmul.mubr.f32.gmra.mxu0 %v1161
      %v1374 = vpop.f32.mrf.mxu0
      %v1375 = vadd.f32 %v1085, %v1374
      %v1376 = vpop.f32.mrf.mxu0
      %1377 = vmatprep.mubr.f32.mxu0 0.0
      %1378 = vmatmul.mubr.f32.gmra.mxu0 %v1164
      %v1379 = vpop.f32.mrf.mxu0
      %v1380 = vadd.f32 %v1085, %v1379
      %v1381 = vpop.f32.mrf.mxu0
      %1382 = vmatprep.mubr.f32.mxu0 0.0
      %1383 = vmatmul.mubr.f32.gmra.mxu0 %v1167
      %v1384 = vpop.f32.mrf.mxu0
      %v1385 = vadd.f32 %v1085, %v1384
      %v1386 = vpop.f32.mrf.mxu0
      %1387 = vmatprep.mubr.f32.mxu0 0.0
      %1388 = vmatmul.mubr.f32.gmra.mxu0 %v1170
      %v1389 = vpop.f32.mrf.mxu0
      %v1390 = vadd.f32 %v1085, %v1389
      %v1391 = vpop.f32.mrf.mxu0
      %1392 = vmatprep.mubr.f32.mxu0 0.0
      %1393 = vmatmul.mubr.f32.gmra.mxu0 %v1173
      %v1394 = vpop.f32.mrf.mxu0
      %v1395 = vadd.f32 %v1085, %v1394
      %v1396 = vpop.f32.mrf.mxu0
      %1397 = vmatprep.mubr.f32.mxu0 0.0
      %1398 = vmatmul.mubr.f32.gmra.mxu0 %v1176
      %v1399 = vpop.f32.mrf.mxu0
      %v1400 = vadd.f32 %v1085, %v1399
      %v1401 = vpop.f32.mrf.mxu0
      %1402 = vmatprep.mubr.f32.mxu0 0.0
      %1403 = vmatmul.mubr.f32.gmra.mxu0 %v1179
      %v1404 = vpop.f32.mrf.mxu0
      %v1405 = vadd.f32 %v1085, %v1404
      %v1406 = vpop.f32.mrf.mxu0
      %1407 = vmatprep.mubr.f32.mxu0 0.0
      %1408 = vmatmul.mubr.f32.gmra.mxu0 %v1182
      %v1409 = vpop.f32.mrf.mxu0
      %v1410 = vadd.f32 %v1085, %v1409
      %v1411 = vpop.f32.mrf.mxu0
      %1412 = vdwg.mxu0
      %v1413 = vsub.f32 0.0, %v1255
      %v1414 = vsub.f32 0.0, %v1260
      %v1415 = vsub.f32 0.0, %v1265
      %v1416 = vsub.f32 0.0, %v1270
      %v1417 = vsub.f32 0.0, %v1275
      %v1418 = vsub.f32 0.0, %v1280
      %v1419 = vsub.f32 0.0, %v1285
      %v1420 = vsub.f32 0.0, %v1290
      %v1421 = vsub.f32 0.0, %v1295
      %v1422 = vsub.f32 0.0, %v1300
      %v1423 = vsub.f32 0.0, %v1305
      %v1424 = vsub.f32 0.0, %v1310
      %v1425 = vsub.f32 0.0, %v1315
      %v1426 = vsub.f32 0.0, %v1320
      %v1427 = vsub.f32 0.0, %v1325
      %v1428 = vsub.f32 0.0, %v1330
      %v1429 = vsub.f32 0.0, %v1335
      %v1430 = vsub.f32 0.0, %v1340
      %v1431 = vsub.f32 0.0, %v1345
      %v1432 = vsub.f32 0.0, %v1350
      %v1433 = vsub.f32 0.0, %v1355
      %v1434 = vsub.f32 0.0, %v1360
      %v1435 = vsub.f32 0.0, %v1365
      %v1436 = vsub.f32 0.0, %v1370
      %v1437 = vsub.f32 0.0, %v1375
      %v1438 = vsub.f32 0.0, %v1380
      %v1439 = vsub.f32 0.0, %v1385
      %v1440 = vsub.f32 0.0, %v1390
      %v1441 = vsub.f32 0.0, %v1395
      %v1442 = vsub.f32 0.0, %v1400
      %v1443 = vsub.f32 0.0, %v1405
      %v1444 = vsub.f32 0.0, %v1410
      %v1445 = vmul.f32 %v1413, 1.442695
      %v1446 = vpow.pop %v1445
      %v1447 = vmul.f32 %v1414, 1.442695
      %v1448 = vpow.pop %v1447
      %v1449 = vmul.f32 %v1415, 1.442695
      %v1450 = vpow.pop %v1449
      %v1451 = vmul.f32 %v1416, 1.442695
      %v1452 = vpow.pop %v1451
      %v1453 = vmul.f32 %v1417, 1.442695
      %v1454 = vpow.pop %v1453
      %v1455 = vmul.f32 %v1418, 1.442695
      %v1456 = vpow.pop %v1455
      %v1457 = vmul.f32 %v1419, 1.442695
      %v1458 = vpow.pop %v1457
      %v1459 = vmul.f32 %v1420, 1.442695
      %v1460 = vpow.pop %v1459
      %v1461 = vmul.f32 %v1421, 1.442695
      %v1462 = vpow.pop %v1461
      %v1463 = vmul.f32 %v1422, 1.442695
      %v1464 = vpow.pop %v1463
      %v1465 = vmul.f32 %v1423, 1.442695
      %v1466 = vpow.pop %v1465
      %v1467 = vmul.f32 %v1424, 1.442695
      %v1468 = vpow.pop %v1467
      %v1469 = vmul.f32 %v1425, 1.442695
      %v1470 = vpow.pop %v1469
      %v1471 = vmul.f32 %v1426, 1.442695
      %v1472 = vpow.pop %v1471
      %v1473 = vmul.f32 %v1427, 1.442695
      %v1474 = vpow.pop %v1473
      %v1475 = vmul.f32 %v1428, 1.442695
      %v1476 = vpow.pop %v1475
      %v1477 = vmul.f32 %v1429, 1.442695
      %v1478 = vpow.pop %v1477
      %v1479 = vmul.f32 %v1430, 1.442695
      %v1480 = vpow.pop %v1479
      %v1481 = vmul.f32 %v1431, 1.442695
      %v1482 = vpow.pop %v1481
      %v1483 = vmul.f32 %v1432, 1.442695
      %v1484 = vpow.pop %v1483
      %v1485 = vmul.f32 %v1433, 1.442695
      %v1486 = vpow.pop %v1485
      %v1487 = vmul.f32 %v1434, 1.442695
      %v1488 = vpow.pop %v1487
      %v1489 = vmul.f32 %v1435, 1.442695
      %v1490 = vpow.pop %v1489
      %v1491 = vmul.f32 %v1436, 1.442695
      %v1492 = vpow.pop %v1491
      %v1493 = vmul.f32 %v1437, 1.442695
      %v1494 = vpow.pop %v1493
      %v1495 = vmul.f32 %v1438, 1.442695
      %v1496 = vpow.pop %v1495
      %v1497 = vmul.f32 %v1439, 1.442695
      %v1498 = vpow.pop %v1497
      %v1499 = vmul.f32 %v1440, 1.442695
      %v1500 = vpow.pop %v1499
      %v1501 = vmul.f32 %v1441, 1.442695
      %v1502 = vpow.pop %v1501
      %v1503 = vmul.f32 %v1442, 1.442695
      %v1504 = vpow.pop %v1503
      %v1505 = vmul.f32 %v1443, 1.442695
      %v1506 = vpow.pop %v1505
      %v1507 = vmul.f32 %v1444, 1.442695
      %v1508 = vpow.pop %v1507
      %v1509 = vadd.f32 %v1446, 1.0
      %v1510 = vadd.f32 %v1448, 1.0
      %v1511 = vadd.f32 %v1450, 1.0
      %v1512 = vadd.f32 %v1452, 1.0
      %v1513 = vadd.f32 %v1454, 1.0
      %v1514 = vadd.f32 %v1456, 1.0
      %v1515 = vadd.f32 %v1458, 1.0
      %v1516 = vadd.f32 %v1460, 1.0
      %v1517 = vadd.f32 %v1462, 1.0
      %v1518 = vadd.f32 %v1464, 1.0
      %v1519 = vadd.f32 %v1466, 1.0
      %v1520 = vadd.f32 %v1468, 1.0
      %v1521 = vadd.f32 %v1470, 1.0
      %v1522 = vadd.f32 %v1472, 1.0
      %v1523 = vadd.f32 %v1474, 1.0
      %v1524 = vadd.f32 %v1476, 1.0
      %v1525 = vadd.f32 %v1478, 1.0
      %v1526 = vadd.f32 %v1480, 1.0
      %v1527 = vadd.f32 %v1482, 1.0
      %v1528 = vadd.f32 %v1484, 1.0
      %v1529 = vadd.f32 %v1486, 1.0
      %v1530 = vadd.f32 %v1488, 1.0
      %v1531 = vadd.f32 %v1490, 1.0
      %v1532 = vadd.f32 %v1492, 1.0
      %v1533 = vadd.f32 %v1494, 1.0
      %v1534 = vadd.f32 %v1496, 1.0
      %v1535 = vadd.f32 %v1498, 1.0
      %v1536 = vadd.f32 %v1500, 1.0
      %v1537 = vadd.f32 %v1502, 1.0
      %v1538 = vadd.f32 %v1504, 1.0
      %v1539 = vadd.f32 %v1506, 1.0
      %v1540 = vadd.f32 %v1508, 1.0
      %v1541 = vrcp.pop %v1509
      %v1542 = vrcp.pop %v1510
      %v1543 = vrcp.pop %v1511
      %v1544 = vrcp.pop %v1512
      %v1545 = vrcp.pop %v1513
      %v1546 = vrcp.pop %v1514
      %v1547 = vrcp.pop %v1515
      %v1548 = vrcp.pop %v1516
      %v1549 = vrcp.pop %v1517
      %v1550 = vrcp.pop %v1518
      %v1551 = vrcp.pop %v1519
      %v1552 = vrcp.pop %v1520
      %v1553 = vrcp.pop %v1521
      %v1554 = vrcp.pop %v1522
      %v1555 = vrcp.pop %v1523
      %v1556 = vrcp.pop %v1524
      %v1557 = vrcp.pop %v1525
      %v1558 = vrcp.pop %v1526
      %v1559 = vrcp.pop %v1527
      %v1560 = vrcp.pop %v1528
      %v1561 = vrcp.pop %v1529
      %v1562 = vrcp.pop %v1530
      %v1563 = vrcp.pop %v1531
      %v1564 = vrcp.pop %v1532
      %v1565 = vrcp.pop %v1533
      %v1566 = vrcp.pop %v1534
      %v1567 = vrcp.pop %v1535
      %v1568 = vrcp.pop %v1536
      %v1569 = vrcp.pop %v1537
      %v1570 = vrcp.pop %v1538
      %v1571 = vrcp.pop %v1539
      %v1572 = vrcp.pop %v1540
      %v1573 = vmul.f32 %v1255, %v1541
      %v1574 = vmul.f32 %v1260, %v1542
      %v1575 = vmul.f32 %v1265, %v1543
      %v1576 = vmul.f32 %v1270, %v1544
      %v1577 = vmul.f32 %v1275, %v1545
      %v1578 = vmul.f32 %v1280, %v1546
      %v1579 = vmul.f32 %v1285, %v1547
      %v1580 = vmul.f32 %v1290, %v1548
      %v1581 = vmul.f32 %v1295, %v1549
      %v1582 = vmul.f32 %v1300, %v1550
      %v1583 = vmul.f32 %v1305, %v1551
      %v1584 = vmul.f32 %v1310, %v1552
      %v1585 = vmul.f32 %v1315, %v1553
      %v1586 = vmul.f32 %v1320, %v1554
      %v1587 = vmul.f32 %v1325, %v1555
      %v1588 = vmul.f32 %v1330, %v1556
      %v1589 = vmul.f32 %v1335, %v1557
      %v1590 = vmul.f32 %v1340, %v1558
      %v1591 = vmul.f32 %v1345, %v1559
      %v1592 = vmul.f32 %v1350, %v1560
      %v1593 = vmul.f32 %v1355, %v1561
      %v1594 = vmul.f32 %v1360, %v1562
      %v1595 = vmul.f32 %v1365, %v1563
      %v1596 = vmul.f32 %v1370, %v1564
      %v1597 = vmul.f32 %v1375, %v1565
      %v1598 = vmul.f32 %v1380, %v1566
      %v1599 = vmul.f32 %v1385, %v1567
      %v1600 = vmul.f32 %v1390, %v1568
      %v1601 = vmul.f32 %v1395, %v1569
      %v1602 = vmul.f32 %v1400, %v1570
      %v1603 = vmul.f32 %v1405, %v1571
      %v1604 = vmul.f32 %v1410, %v1572
      %vm1605 = vcmask 64512
      %1606 = vst.msk [vmem:[%s197] sm:$0xff] %vm1605, %v1573
      %1607 = vst.msk [vmem:[%s197 + $0x8] sm:$0xff] %vm1605, %v1574
      %1608 = vst.msk [vmem:[%s197 + $0x10] sm:$0xff] %vm1605, %v1575
      %1609 = vst.msk [vmem:[%s197 + $0x18] sm:$0xff] %vm1605, %v1576
      %1610 = vst.msk [vmem:[%s197 + $0x20] sm:$0xff] %vm1605, %v1577
      %1611 = vst.msk [vmem:[%s197 + $0x28] sm:$0xff] %vm1605, %v1578
      %1612 = vst.msk [vmem:[%s197 + $0x30] sm:$0xff] %vm1605, %v1579
      %1613 = vst.msk [vmem:[%s197 + $0x38] sm:$0xff] %vm1605, %v1580
      %1614 = vst.msk [vmem:[%s197 + $0x40] sm:$0xff] %vm1605, %v1581
      %1615 = vst.msk [vmem:[%s197 + $0x48] sm:$0xff] %vm1605, %v1582
      %1616 = vst.msk [vmem:[%s197 + $0x50] sm:$0xff] %vm1605, %v1583
      %1617 = vst.msk [vmem:[%s197 + $0x58] sm:$0xff] %vm1605, %v1584
      %1618 = vst.msk [vmem:[%s197 + $0x60] sm:$0xff] %vm1605, %v1585
      %1619 = vst.msk [vmem:[%s197 + $0x68] sm:$0xff] %vm1605, %v1586
      %1620 = vst.msk [vmem:[%s197 + $0x70] sm:$0xff] %vm1605, %v1587
      %1621 = vst.msk [vmem:[%s197 + $0x78] sm:$0xff] %vm1605, %v1588
      %1622 = vst.msk [vmem:[%s197 + $0x80] sm:$0xff] %vm1605, %v1589
      %1623 = vst.msk [vmem:[%s197 + $0x88] sm:$0xff] %vm1605, %v1590
      %1624 = vst.msk [vmem:[%s197 + $0x90] sm:$0xff] %vm1605, %v1591
      %1625 = vst.msk [vmem:[%s197 + $0x98] sm:$0xff] %vm1605, %v1592
      %1626 = vst.msk [vmem:[%s197 + $0xa0] sm:$0xff] %vm1605, %v1593
      %1627 = vst.msk [vmem:[%s197 + $0xa8] sm:$0xff] %vm1605, %v1594
      %1628 = vst.msk [vmem:[%s197 + $0xb0] sm:$0xff] %vm1605, %v1595
      %1629 = vst.msk [vmem:[%s197 + $0xb8] sm:$0xff] %vm1605, %v1596
      %1630 = vst.msk [vmem:[%s197 + $0xc0] sm:$0xff] %vm1605, %v1597
      %1631 = vst.msk [vmem:[%s197 + $0xc8] sm:$0xff] %vm1605, %v1598
      %1632 = vst.msk [vmem:[%s197 + $0xd0] sm:$0xff] %vm1605, %v1599
      %1633 = vst.msk [vmem:[%s197 + $0xd8] sm:$0xff] %vm1605, %v1600
      %1634 = vst.msk [vmem:[%s197 + $0xe0] sm:$0xff] %vm1605, %v1601
      %1635 = vst.msk [vmem:[%s197 + $0xe8] sm:$0xff] %vm1605, %v1602
      %1636 = vst.msk [vmem:[%s197 + $0xf0] sm:$0xff] %vm1605, %v1603
      %1637 = vst.msk [vmem:[%s197 + $0xf8] sm:$0xff] %vm1605, %v1604
      %p1638 = scmp.lt.s32.totalorder %s15, 1
      %s1639 = scalar_select %p1638, %s15, 1
      %s1640 = smul.addr %s1639, 32
      %s1641 = smul.addr %s1640, 8
      %s1642 = scalar_lea.vmem %s4, %s1641
      // Predicated region
      $region37: #{tpu_custom_call.1} parent=35 // pred_check
        %p1643 = pneg %p122
      $region38: #{tpu_custom_call.1} parent=35 // pred_check_branch
        %1645 = sbr.rel (%p1643) target = $region40
      $region39: #{tpu_custom_call.1} parent=35 // pred_region
        _
      $region40: #{tpu_custom_call.1} parent=35 // pred_fallthru
        _
    $region36: #{tpu_custom_call.1} parent=5 // pred_fallthru
      _
    %p1646 = scmp.le.s32.totalorder 2, %s10
    // Predicated region
    $region41: #{tpu_custom_call.1} parent=5 // pred_check
      %p1647 = pneg %p1646
    $region42: #{tpu_custom_call.1} parent=5 // pred_check_branch
      %1649 = sbr.rel (%p1647) target = $region44
    $region43: #{tpu_custom_call.1} parent=5 // pred_region
      %s1650 = ssub.s32 %s10, 2
      // Predicated region
      $region45: #{tpu_custom_call.1} parent=43 // pred_check
        %p1651 = pneg %p128
      $region46: #{tpu_custom_call.1} parent=43 // pred_check_branch
        %1653 = sbr.rel (%p1651) target = $region48
      $region47: #{tpu_custom_call.1} parent=43 // pred_region
        %p1654 = scmp.lt.s32.totalorder %s16, 1
        %s1655 = scalar_select %p1654, %s16, 1
        %s1656 = smul.addr %s1655, 32
        %s1657 = smul.addr %s1656, 8
        %s1658 = scalar_lea.vmem %s4, %s1657
      $region48: #{tpu_custom_call.1} parent=43 // pred_fallthru
        _
    $region44: #{tpu_custom_call.1} parent=5 // pred_fallthru
      _
  $region6: #{tpu_custom_call.1} parent=0 // loop_footer
    %s14 = sadd.s32 1, %s10
  $region7: #{tpu_custom_call.1} parent=0 // loop_footer_branch
    %9 = sbr.rel target = $region3
  $region8: #{tpu_custom_call.1} parent=0 // loop_exit
    _

</llo_original>
